<compile_context>
chip_gen: v5e
topology: v5e:2x2
jax: 0.10.0
libtpu: 0.0.40
codegen_flags: <defaults>
</compile_context>

<pallas_src>
import functools

import jax
import jax.numpy as jnp
from jax.experimental import pallas as pl
from jax.experimental.pallas import tpu as pltpu


def _lrelu(x):
    # The PyTorch module uses nn.LeakyReLU(0.1) explicitly (not the 0.01 default).
    return jnp.where(x >= 0, x, 0.1 * x)


# Tap order is kh-major (kh=0,1,2 ; kw=0,1,2), i.e. (dh, dw) with d = k - 1.
# Must match the weight-column order produced by _conv_w2d and the mask order
# produced by _tap_masks.
_TAP_OFFSETS = tuple((dh, dw) for dh in (-1, 0, 1) for dw in (-1, 0, 1))


# ----------------------------------------------------------------------------
# Fused DPCAB kernel (batch_block samples per grid step)
# ----------------------------------------------------------------------------
def _dpcab_kernel(
    # inputs
    x0_ref, x1_ref, masks_ref,
    b1w1_ref, b1b1_ref, b1w2_ref, b1b2_ref,
    b2w1_ref, b2b1_ref, b2w2_ref, b2b2_ref,
    ca1w_ref, ca1b_ref,
    d1dw_ref, d1db_ref, d1uw_ref, d1ub_ref,
    d2dw_ref, d2db_ref, d2uw_ref, d2ub_ref,
    # outputs
    y0_ref, y1_ref,
    *, H, W,
):
    HW = H * W
    inv_hw = 1.0 / float(HW)

    def taps(feat):
        """9 shifted+masked copies of feat (C, HW); emulates 'same' zero padding.

        pltpu.roll follows jnp.roll semantics, so shift = (-delta) % HW gives
        tap[p] = feat[p + delta].  The mask zeroes both the out-of-image
        positions and every position where the circular roll wrapped.
        """
        out = []
        for idx, (dh, dw) in enumerate(_TAP_OFFSETS):
            delta = dh * W + dw
            if delta == 0:
                t = feat
            else:
                t = pltpu.roll(feat, shift=(-delta) % HW, axis=1)
                t = t * masks_ref[idx]                    # (1, HW) lane mask
            out.append(t)
        return out

    def conv3x3(tap_list, w_ref, b_ref):
        """One fused MXU matmul: (Cout, 9*Cin_total) @ (9*Cin_total, HW)."""
        xk = jnp.concatenate(tap_list, axis=0)            # sublane-aligned stack
        out = jnp.dot(w_ref[...], xk, preferred_element_type=jnp.float32)
        return out + b_ref[...]                           # (Cout, 1) broadcast

    def ca_layer(feat, dw_ref, db_ref, uw_ref, ub_ref):
        """Channel attention on a (C, HW) value — squeeze-excite on VPU/XLU/EUP."""
        y = jnp.sum(feat, axis=1, keepdims=True) * inv_hw             # (C, 1)
        h = jnp.sum(dw_ref[...] * y, axis=0, keepdims=True) + db_ref[...]   # (1, r)
        h = jnp.maximum(h, 0.0)
        s = jnp.sum(uw_ref[...] * h, axis=1, keepdims=True) + ub_ref[...]   # (C, 1)
        s = 1.0 / (1.0 + jnp.exp(-s))                                  # sigmoid
        return feat * s

    def one_sample(x0, x1):
        # body1 / body2: conv -> LeakyReLU -> conv (all register/VMEM resident)
        t1 = _lrelu(conv3x3(taps(x0), b1w1_ref, b1b1_ref))
        f1 = conv3x3(taps(t1), b1w2_ref, b1b2_ref)
        t2 = _lrelu(conv3x3(taps(x1), b2w1_ref, b2b1_ref))
        f2 = conv3x3(taps(t2), b2w2_ref, b2b2_ref)
        # CA_body1: LeakyReLU -> conv(nf1+nf2 -> nf1) over concat([f1, f2]),
        # folded into a single (nf1, 9*(nf1+nf2)) @ (9*(nf1+nf2), HW) matmul.
        g = conv3x3(taps(_lrelu(f1)) + taps(_lrelu(f2)), ca1w_ref, ca1b_ref)
        # CALayer + fused residual adds.
        y0 = x0 + ca_layer(g, d1dw_ref, d1db_ref, d1uw_ref, d1ub_ref)
        y1 = x1 + ca_layer(f2, d2dw_ref, d2db_ref, d2uw_ref, d2ub_ref)
        return y0, y1

    for b in range(x0_ref.shape[0]):                      # static unroll, batch_block small
        x0 = x0_ref[b].astype(jnp.float32)                # (nf1, HW)
        x1 = x1_ref[b].astype(jnp.float32)                # (nf2, HW)
        y0, y1 = one_sample(x0, x1)
        y0_ref[b] = y0.astype(y0_ref.dtype)
        y1_ref[b] = y1.astype(y1_ref.dtype)


# ----------------------------------------------------------------------------
# Wrapper
# ----------------------------------------------------------------------------
def _conv_w2d(w):
    """HWIO (3, 3, Cin, Cout) -> (Cout, 9*Cin), columns ordered (kh, kw, cin)."""
    cout = w.shape[-1]
    return jnp.transpose(w, (3, 0, 1, 2)).reshape(cout, -1)


def _tap_masks(H, W):
    """(9, 1, H*W) float masks — valid-input indicator for each conv tap."""
    HW = H * W
    hh, ww = jnp.meshgrid(jnp.arange(H), jnp.arange(W), indexing="ij")
    hh = hh.reshape(1, HW)
    ww = ww.reshape(1, HW)
    masks = []
    for dh, dw in _TAP_OFFSETS:
        valid = (hh + dh >= 0) & (hh + dh < H) & (ww + dw >= 0) & (ww + dw < W)
        masks.append(valid.astype(jnp.float32))
    return jnp.stack(masks, axis=0)


def dpcab_forward(x0, x1, p, *, batch_block=1):
    """x0: (N, nf1, H, W), x1: (N, nf2, H, W)  (NCHW, like the PyTorch module).

    batch_block: samples per grid step.  Keep 1 for v7x (2 TensorCores, N>=2
    feeds both); use >1 on single-TC v5e/v6e to amortize per-step overhead.
    """
    N, nf1, H, W = x0.shape
    nf2 = x1.shape[1]
    HW = H * W
    assert HW % 128 == 0, "H*W must be a multiple of 128 for lane-dense rows"
    assert x1.shape[0] == N and x1.shape[2:] == (H, W)
    assert N % batch_block == 0

    # CA_body1 conv weight over concat([f1, f2], channel) as one fused matrix:
    # columns [0, 9*nf1) act on f1's taps, the rest on f2's taps.
    ca1_w2d = jnp.concatenate(
        [_conv_w2d(p["ca1_w"][:, :, :nf1, :]),
         _conv_w2d(p["ca1_w"][:, :, nf1:, :])], axis=1)

    weights = [
        _conv_w2d(p["b1_w1"]), p["b1_b1"], _conv_w2d(p["b1_w2"]), p["b1_b2"],
        _conv_w2d(p["b2_w1"]), p["b2_b1"], _conv_w2d(p["b2_w2"]), p["b2_b2"],
        ca1_w2d, p["ca1_b"],
        # CA FC params in kernel-friendly orientation:
        #   down weight (C, r), down bias (1, r), up weight (C, r), up bias (C, 1)
        p["ca1_du_w1"], p["ca1_du_b1"], p["ca1_du_w2"].T, p["ca1_du_b2"].T,
        p["ca2_du_w1"], p["ca2_du_b1"], p["ca2_du_w2"].T, p["ca2_du_b2"].T,
    ]
    masks = _tap_masks(H, W)

    # Free reshapes: NCHW -> (N, C, H*W) rows are lane-dense (last dim % 128 == 0).
    x0f = x0.reshape(N, nf1, HW)
    x1f = x1.reshape(N, nf2, HW)

    def act_spec(C):
        return pl.BlockSpec((batch_block, C, HW), lambda n: (n, 0, 0))

    def const_spec(arr):
        nd = arr.ndim
        return pl.BlockSpec(arr.shape, lambda n, nd=nd: (0,) * nd)

    kernel = functools.partial(_dpcab_kernel, H=H, W=W)
    y0, y1 = pl.pallas_call(
        kernel,
        out_shape=(jax.ShapeDtypeStruct((N, nf1, HW), x0.dtype),
                   jax.ShapeDtypeStruct((N, nf2, HW), x1.dtype)),
        grid=(N // batch_block,),
        in_specs=([act_spec(nf1), act_spec(nf2), const_spec(masks)]
                  + [const_spec(w) for w in weights]),
        out_specs=(act_spec(nf1), act_spec(nf2)),
        compiler_params=pltpu.CompilerParams(dimension_semantics=("parallel",)),
    )(x0f, x1f, masks, *weights)
    return y0.reshape(N, nf1, H, W), y1.reshape(N, nf2, H, W)


# ----------------------------------------------------------------------------
# Parameter init (deterministic, in-script; weights stored HWIO, biases (C,1))
# ----------------------------------------------------------------------------
def init_dpcab_params(key, nf1, nf2, ksize1=3, ksize2=3, reduction=4):
    assert ksize1 == 3 and ksize2 == 3
    keys = jax.random.split(key, 18)

    def conv_w(k, cin, cout):
        return (1.0 / jnp.sqrt(9.0 * cin)) * jax.random.normal(k, (3, 3, cin, cout), jnp.float32)

    def lin_w(k, cin, cout):
        return (1.0 / jnp.sqrt(float(cin))) * jax.random.normal(k, (cin, cout), jnp.float32)

    def bias(k, *shape):
        return 0.1 * jax.random.normal(k, shape, jnp.float32)

    r1, r2 = nf1 // reduction, nf2 // reduction
    return {
        # body1: Conv(nf1,nf1,3) -> LReLU(0.1) -> Conv(nf1,nf1,3)
        "b1_w1": conv_w(keys[0], nf1, nf1), "b1_b1": bias(keys[1], nf1, 1),
        "b1_w2": conv_w(keys[2], nf1, nf1), "b1_b2": bias(keys[3], nf1, 1),
        # body2: Conv(nf2,nf2,3) -> LReLU(0.1) -> Conv(nf2,nf2,3)
        "b2_w1": conv_w(keys[4], nf2, nf2), "b2_b1": bias(keys[5], nf2, 1),
        "b2_w2": conv_w(keys[6], nf2, nf2), "b2_b2": bias(keys[7], nf2, 1),
        # CA_body1: LReLU(0.1) -> Conv(nf1+nf2, nf1, 3) -> CALayer(nf1, reduction)
        "ca1_w": conv_w(keys[8], nf1 + nf2, nf1), "ca1_b": bias(keys[9], nf1, 1),
        "ca1_du_w1": lin_w(keys[10], nf1, r1), "ca1_du_b1": bias(keys[11], 1, r1),
        "ca1_du_w2": lin_w(keys[12], r1, nf1), "ca1_du_b2": bias(keys[13], 1, nf1),
        # CA_body2: CALayer(nf2, reduction)
        "ca2_du_w1": lin_w(keys[14], nf2, r2), "ca2_du_b1": bias(keys[15], 1, r2),
        "ca2_du_w2": lin_w(keys[16], r2, nf2), "ca2_du_b2": bias(keys[17], 1, nf2),
    }


# ----------------------------------------------------------------------------
# Pure-JAX reference (NCHW) for the correctness check
# ----------------------------------------------------------------------------
def _conv_ref(x, w, b):
    y = jax.lax.conv_general_dilated(
        x, w, window_strides=(1, 1), padding="SAME",
        dimension_numbers=("NCHW", "HWIO", "NCHW"),
        precision=jax.lax.Precision.HIGHEST)
    return y + b.reshape(1, -1, 1, 1)


def _ca_ref(x, w1, b1, w2, b2):
    y = jnp.mean(x, axis=(2, 3))                          # (N, C)
    h = jnp.maximum(y @ w1 + b1, 0.0)
    s = jax.nn.sigmoid(h @ w2 + b2)
    return x * s[:, :, None, None]


def dpcab_ref(x0, x1, p):
    f1 = _conv_ref(_lrelu(_conv_ref(x0, p["b1_w1"], p["b1_b1"])), p["b1_w2"], p["b1_b2"])
    f2 = _conv_ref(_lrelu(_conv_ref(x1, p["b2_w1"], p["b2_b1"])), p["b2_w2"], p["b2_b2"])
    g = _conv_ref(_lrelu(jnp.concatenate([f1, f2], axis=1)), p["ca1_w"], p["ca1_b"])
    ca_f1 = _ca_ref(g, p["ca1_du_w1"], p["ca1_du_b1"], p["ca1_du_w2"], p["ca1_du_b2"])
    ca_f2 = _ca_ref(f2, p["ca2_du_w1"], p["ca2_du_b1"], p["ca2_du_w2"], p["ca2_du_b2"])
    return x0 + ca_f1, x1 + ca_f2


if __name__ == "__main__":
    key = jax.random.PRNGKey(0)
    k0, k1, kp = jax.random.split(key, 3)

    N, H, W = 2, 16, 16
    nf1, nf2, reduction = 8, 8, 4

    x0 = jax.random.normal(k0, (N, nf1, H, W), jnp.float32)
    x1 = jax.random.normal(k1, (N, nf2, H, W), jnp.float32)
    params = init_dpcab_params(kp, nf1, nf2, reduction=reduction)

    y0, y1 = jax.jit(dpcab_forward)(x0, x1, params)
    jax.block_until_ready((y0, y1))

    r0, r1 = dpcab_ref(x0, x1, params)
    assert jnp.allclose(y0, r0, atol=1e-4, rtol=1e-4)
    assert jnp.allclose(y1, r1, atol=1e-4, rtol=1e-4)

    print("KERNEL_OK")
</pallas_src>

<mosaic_0001>
module attributes {stable_mosaic.version = 11 : i64} {
  func.func @_dpcab_kernel(%arg0: i32, %arg1: memref<1x8x256xf32, #tpu.memory_space<vmem>>, %arg2: memref<1x8x256xf32, #tpu.memory_space<vmem>>, %arg3: memref<9x1x256xf32, #tpu.memory_space<vmem>>, %arg4: memref<8x72xf32, #tpu.memory_space<vmem>>, %arg5: memref<8x1xf32, #tpu.memory_space<vmem>>, %arg6: memref<8x72xf32, #tpu.memory_space<vmem>>, %arg7: memref<8x1xf32, #tpu.memory_space<vmem>>, %arg8: memref<8x72xf32, #tpu.memory_space<vmem>>, %arg9: memref<8x1xf32, #tpu.memory_space<vmem>>, %arg10: memref<8x72xf32, #tpu.memory_space<vmem>>, %arg11: memref<8x1xf32, #tpu.memory_space<vmem>>, %arg12: memref<8x144xf32, #tpu.memory_space<vmem>>, %arg13: memref<8x1xf32, #tpu.memory_space<vmem>>, %arg14: memref<8x2xf32, #tpu.memory_space<vmem>>, %arg15: memref<1x2xf32, #tpu.memory_space<vmem>>, %arg16: memref<8x2xf32, #tpu.memory_space<vmem>>, %arg17: memref<8x1xf32, #tpu.memory_space<vmem>>, %arg18: memref<8x2xf32, #tpu.memory_space<vmem>>, %arg19: memref<1x2xf32, #tpu.memory_space<vmem>>, %arg20: memref<8x2xf32, #tpu.memory_space<vmem>>, %arg21: memref<8x1xf32, #tpu.memory_space<vmem>>, %arg22: memref<1x8x256xf32, #tpu.memory_space<vmem>>, %arg23: memref<1x8x256xf32, #tpu.memory_space<vmem>>) attributes {dimension_semantics = [#tpu.dimension_semantics<parallel>], iteration_bounds = array<i64: 2>, scalar_prefetch = 0 : i64, scratch_operands = 0 : i64, tpu.core_type = #tpu.core_type<tc>, window_params = [{transform_indices = @transform_0, window_bounds = array<i64: 1, 8, 256>}, {transform_indices = @transform_1, window_bounds = array<i64: 1, 8, 256>}, {pipeline_mode = #tpu.pipeline_mode<synchronous>, transform_indices = @transform_2, window_bounds = array<i64: 9, 1, 256>}, {pipeline_mode = #tpu.pipeline_mode<synchronous>, transform_indices = @transform_3, window_bounds = array<i64: 8, 72>}, {pipeline_mode = #tpu.pipeline_mode<synchronous>, transform_indices = @transform_4, window_bounds = array<i64: 8, 1>}, {pipeline_mode = #tpu.pipeline_mode<synchronous>, transform_indices = @transform_5, window_bounds = array<i64: 8, 72>}, {pipeline_mode = #tpu.pipeline_mode<synchronous>, transform_indices = @transform_6, window_bounds = array<i64: 8, 1>}, {pipeline_mode = #tpu.pipeline_mode<synchronous>, transform_indices = @transform_7, window_bounds = array<i64: 8, 72>}, {pipeline_mode = #tpu.pipeline_mode<synchronous>, transform_indices = @transform_8, window_bounds = array<i64: 8, 1>}, {pipeline_mode = #tpu.pipeline_mode<synchronous>, transform_indices = @transform_9, window_bounds = array<i64: 8, 72>}, {pipeline_mode = #tpu.pipeline_mode<synchronous>, transform_indices = @transform_10, window_bounds = array<i64: 8, 1>}, {pipeline_mode = #tpu.pipeline_mode<synchronous>, transform_indices = @transform_11, window_bounds = array<i64: 8, 144>}, {pipeline_mode = #tpu.pipeline_mode<synchronous>, transform_indices = @transform_12, window_bounds = array<i64: 8, 1>}, {pipeline_mode = #tpu.pipeline_mode<synchronous>, transform_indices = @transform_13, window_bounds = array<i64: 8, 2>}, {pipeline_mode = #tpu.pipeline_mode<synchronous>, transform_indices = @transform_14, window_bounds = array<i64: 1, 2>}, {pipeline_mode = #tpu.pipeline_mode<synchronous>, transform_indices = @transform_15, window_bounds = array<i64: 8, 2>}, {pipeline_mode = #tpu.pipeline_mode<synchronous>, transform_indices = @transform_16, window_bounds = array<i64: 8, 1>}, {pipeline_mode = #tpu.pipeline_mode<synchronous>, transform_indices = @transform_17, window_bounds = array<i64: 8, 2>}, {pipeline_mode = #tpu.pipeline_mode<synchronous>, transform_indices = @transform_18, window_bounds = array<i64: 1, 2>}, {pipeline_mode = #tpu.pipeline_mode<synchronous>, transform_indices = @transform_19, window_bounds = array<i64: 8, 2>}, {pipeline_mode = #tpu.pipeline_mode<synchronous>, transform_indices = @transform_20, window_bounds = array<i64: 8, 1>}, {transform_indices = @transform_21, window_bounds = array<i64: 1, 8, 256>}, {transform_indices = @transform_22, window_bounds = array<i64: 1, 8, 256>}]} {
    %c0 = arith.constant 0 : index
    %c0_0 = arith.constant 0 : index
    %c0_1 = arith.constant 0 : index
    %0 = vector.load %arg1[%c0, %c0_0, %c0_1] : memref<1x8x256xf32, #tpu.memory_space<vmem>>, vector<1x8x256xf32>
    %1 = vector.shape_cast %0 : vector<1x8x256xf32> to vector<8x256xf32>
    %c0_2 = arith.constant 0 : index
    %c0_3 = arith.constant 0 : index
    %c0_4 = arith.constant 0 : index
    %2 = vector.load %arg2[%c0_2, %c0_3, %c0_4] : memref<1x8x256xf32, #tpu.memory_space<vmem>>, vector<1x8x256xf32>
    %3 = vector.shape_cast %2 : vector<1x8x256xf32> to vector<8x256xf32>
    %c17_i32 = arith.constant 17 : i32
    %4 = tpu.dynamic_rotate %1 by %c17_i32 dim 1 : vector<8x256xf32>, i32 -> vector<8x256xf32>
    %c0_5 = arith.constant 0 : index
    %c0_6 = arith.constant 0 : index
    %c0_7 = arith.constant 0 : index
    %5 = vector.load %arg3[%c0_5, %c0_6, %c0_7] : memref<9x1x256xf32, #tpu.memory_space<vmem>>, vector<1x1x256xf32>
    %6 = vector.shape_cast %5 : vector<1x1x256xf32> to vector<1x256xf32>
    %7 = vector.broadcast %6 : vector<1x256xf32> to vector<8x256xf32>
    %8 = arith.mulf %4, %7 : vector<8x256xf32>
    %c16_i32 = arith.constant 16 : i32
    %9 = tpu.dynamic_rotate %1 by %c16_i32 dim 1 : vector<8x256xf32>, i32 -> vector<8x256xf32>
    %c1 = arith.constant 1 : index
    %c0_8 = arith.constant 0 : index
    %c0_9 = arith.constant 0 : index
    %10 = vector.load %arg3[%c1, %c0_8, %c0_9] : memref<9x1x256xf32, #tpu.memory_space<vmem>>, vector<1x1x256xf32>
    %11 = vector.shape_cast %10 : vector<1x1x256xf32> to vector<1x256xf32>
    %12 = vector.broadcast %11 : vector<1x256xf32> to vector<8x256xf32>
    %13 = arith.mulf %9, %12 : vector<8x256xf32>
    %c15_i32 = arith.constant 15 : i32
    %14 = tpu.dynamic_rotate %1 by %c15_i32 dim 1 : vector<8x256xf32>, i32 -> vector<8x256xf32>
    %c2 = arith.constant 2 : index
    %c0_10 = arith.constant 0 : index
    %c0_11 = arith.constant 0 : index
    %15 = vector.load %arg3[%c2, %c0_10, %c0_11] : memref<9x1x256xf32, #tpu.memory_space<vmem>>, vector<1x1x256xf32>
    %16 = vector.shape_cast %15 : vector<1x1x256xf32> to vector<1x256xf32>
    %17 = vector.broadcast %16 : vector<1x256xf32> to vector<8x256xf32>
    %18 = arith.mulf %14, %17 : vector<8x256xf32>
    %c1_i32 = arith.constant 1 : i32
    %19 = tpu.dynamic_rotate %1 by %c1_i32 dim 1 : vector<8x256xf32>, i32 -> vector<8x256xf32>
    %c3 = arith.constant 3 : index
    %c0_12 = arith.constant 0 : index
    %c0_13 = arith.constant 0 : index
    %20 = vector.load %arg3[%c3, %c0_12, %c0_13] : memref<9x1x256xf32, #tpu.memory_space<vmem>>, vector<1x1x256xf32>
    %21 = vector.shape_cast %20 : vector<1x1x256xf32> to vector<1x256xf32>
    %22 = vector.broadcast %21 : vector<1x256xf32> to vector<8x256xf32>
    %23 = arith.mulf %19, %22 : vector<8x256xf32>
    %c255_i32 = arith.constant 255 : i32
    %24 = tpu.dynamic_rotate %1 by %c255_i32 dim 1 : vector<8x256xf32>, i32 -> vector<8x256xf32>
    %c5 = arith.constant 5 : index
    %c0_14 = arith.constant 0 : index
    %c0_15 = arith.constant 0 : index
    %25 = vector.load %arg3[%c5, %c0_14, %c0_15] : memref<9x1x256xf32, #tpu.memory_space<vmem>>, vector<1x1x256xf32>
    %26 = vector.shape_cast %25 : vector<1x1x256xf32> to vector<1x256xf32>
    %27 = vector.broadcast %26 : vector<1x256xf32> to vector<8x256xf32>
    %28 = arith.mulf %24, %27 : vector<8x256xf32>
    %c241_i32 = arith.constant 241 : i32
    %29 = tpu.dynamic_rotate %1 by %c241_i32 dim 1 : vector<8x256xf32>, i32 -> vector<8x256xf32>
    %c6 = arith.constant 6 : index
    %c0_16 = arith.constant 0 : index
    %c0_17 = arith.constant 0 : index
    %30 = vector.load %arg3[%c6, %c0_16, %c0_17] : memref<9x1x256xf32, #tpu.memory_space<vmem>>, vector<1x1x256xf32>
    %31 = vector.shape_cast %30 : vector<1x1x256xf32> to vector<1x256xf32>
    %32 = vector.broadcast %31 : vector<1x256xf32> to vector<8x256xf32>
    %33 = arith.mulf %29, %32 : vector<8x256xf32>
    %c240_i32 = arith.constant 240 : i32
    %34 = tpu.dynamic_rotate %1 by %c240_i32 dim 1 : vector<8x256xf32>, i32 -> vector<8x256xf32>
    %c7 = arith.constant 7 : index
    %c0_18 = arith.constant 0 : index
    %c0_19 = arith.constant 0 : index
    %35 = vector.load %arg3[%c7, %c0_18, %c0_19] : memref<9x1x256xf32, #tpu.memory_space<vmem>>, vector<1x1x256xf32>
    %36 = vector.shape_cast %35 : vector<1x1x256xf32> to vector<1x256xf32>
    %37 = vector.broadcast %36 : vector<1x256xf32> to vector<8x256xf32>
    %38 = arith.mulf %34, %37 : vector<8x256xf32>
    %c239_i32 = arith.constant 239 : i32
    %39 = tpu.dynamic_rotate %1 by %c239_i32 dim 1 : vector<8x256xf32>, i32 -> vector<8x256xf32>
    %c8 = arith.constant 8 : index
    %c0_20 = arith.constant 0 : index
    %c0_21 = arith.constant 0 : index
    %40 = vector.load %arg3[%c8, %c0_20, %c0_21] : memref<9x1x256xf32, #tpu.memory_space<vmem>>, vector<1x1x256xf32>
    %41 = vector.shape_cast %40 : vector<1x1x256xf32> to vector<1x256xf32>
    %42 = vector.broadcast %41 : vector<1x256xf32> to vector<8x256xf32>
    %43 = arith.mulf %39, %42 : vector<8x256xf32>
    %44 = tpu.concatenate %8, %13, %18, %23, %1, %28, %33, %38, %43 in 0 : vector<8x256xf32>, vector<8x256xf32>, vector<8x256xf32>, vector<8x256xf32>, vector<8x256xf32>, vector<8x256xf32>, vector<8x256xf32>, vector<8x256xf32>, vector<8x256xf32> -> vector<72x256xf32>
    %c0_22 = arith.constant 0 : index
    %c0_23 = arith.constant 0 : index
    %45 = vector.load %arg4[%c0_22, %c0_23] : memref<8x72xf32, #tpu.memory_space<vmem>>, vector<8x72xf32>
    %cst = arith.constant dense<0.000000e+00> : vector<8x256xf32>
    %46 = tpu.matmul %45, %44, %cst {dimension_numbers = #tpu.dot_dimension_numbers<[1], [0], [0], [1], [0, 0, 1, 1], [], []>} : vector<8x72xf32>, vector<72x256xf32>, vector<8x256xf32> -> vector<8x256xf32>
    %c0_24 = arith.constant 0 : index
    %c0_25 = arith.constant 0 : index
    %47 = vector.load %arg5[%c0_24, %c0_25] : memref<8x1xf32, #tpu.memory_space<vmem>>, vector<8x1xf32>
    %48 = vector.broadcast %47 : vector<8x1xf32> to vector<8x256xf32>
    %49 = arith.addf %46, %48 : vector<8x256xf32>
    %cst_26 = arith.constant 0.000000e+00 : f32
    %50 = vector.broadcast %cst_26 : f32 to vector<8x256xf32>
    %51 = arith.cmpf oge, %49, %50 : vector<8x256xf32>
    %cst_27 = arith.constant 1.000000e-01 : f32
    %52 = vector.broadcast %cst_27 : f32 to vector<8x256xf32>
    %53 = arith.mulf %52, %49 : vector<8x256xf32>
    %54 = arith.select %51, %49, %53 : vector<8x256xi1>, vector<8x256xf32>
    %c17_i32_28 = arith.constant 17 : i32
    %55 = tpu.dynamic_rotate %54 by %c17_i32_28 dim 1 : vector<8x256xf32>, i32 -> vector<8x256xf32>
    %c0_29 = arith.constant 0 : index
    %c0_30 = arith.constant 0 : index
    %c0_31 = arith.constant 0 : index
    %56 = vector.load %arg3[%c0_29, %c0_30, %c0_31] : memref<9x1x256xf32, #tpu.memory_space<vmem>>, vector<1x1x256xf32>
    %57 = vector.shape_cast %56 : vector<1x1x256xf32> to vector<1x256xf32>
    %58 = vector.broadcast %57 : vector<1x256xf32> to vector<8x256xf32>
    %59 = arith.mulf %55, %58 : vector<8x256xf32>
    %c16_i32_32 = arith.constant 16 : i32
    %60 = tpu.dynamic_rotate %54 by %c16_i32_32 dim 1 : vector<8x256xf32>, i32 -> vector<8x256xf32>
    %c1_33 = arith.constant 1 : index
    %c0_34 = arith.constant 0 : index
    %c0_35 = arith.constant 0 : index
    %61 = vector.load %arg3[%c1_33, %c0_34, %c0_35] : memref<9x1x256xf32, #tpu.memory_space<vmem>>, vector<1x1x256xf32>
    %62 = vector.shape_cast %61 : vector<1x1x256xf32> to vector<1x256xf32>
    %63 = vector.broadcast %62 : vector<1x256xf32> to vector<8x256xf32>
    %64 = arith.mulf %60, %63 : vector<8x256xf32>
    %c15_i32_36 = arith.constant 15 : i32
    %65 = tpu.dynamic_rotate %54 by %c15_i32_36 dim 1 : vector<8x256xf32>, i32 -> vector<8x256xf32>
    %c2_37 = arith.constant 2 : index
    %c0_38 = arith.constant 0 : index
    %c0_39 = arith.constant 0 : index
    %66 = vector.load %arg3[%c2_37, %c0_38, %c0_39] : memref<9x1x256xf32, #tpu.memory_space<vmem>>, vector<1x1x256xf32>
    %67 = vector.shape_cast %66 : vector<1x1x256xf32> to vector<1x256xf32>
    %68 = vector.broadcast %67 : vector<1x256xf32> to vector<8x256xf32>
    %69 = arith.mulf %65, %68 : vector<8x256xf32>
    %c1_i32_40 = arith.constant 1 : i32
    %70 = tpu.dynamic_rotate %54 by %c1_i32_40 dim 1 : vector<8x256xf32>, i32 -> vector<8x256xf32>
    %c3_41 = arith.constant 3 : index
    %c0_42 = arith.constant 0 : index
    %c0_43 = arith.constant 0 : index
    %71 = vector.load %arg3[%c3_41, %c0_42, %c0_43] : memref<9x1x256xf32, #tpu.memory_space<vmem>>, vector<1x1x256xf32>
    %72 = vector.shape_cast %71 : vector<1x1x256xf32> to vector<1x256xf32>
    %73 = vector.broadcast %72 : vector<1x256xf32> to vector<8x256xf32>
    %74 = arith.mulf %70, %73 : vector<8x256xf32>
    %c255_i32_44 = arith.constant 255 : i32
    %75 = tpu.dynamic_rotate %54 by %c255_i32_44 dim 1 : vector<8x256xf32>, i32 -> vector<8x256xf32>
    %c5_45 = arith.constant 5 : index
    %c0_46 = arith.constant 0 : index
    %c0_47 = arith.constant 0 : index
    %76 = vector.load %arg3[%c5_45, %c0_46, %c0_47] : memref<9x1x256xf32, #tpu.memory_space<vmem>>, vector<1x1x256xf32>
    %77 = vector.shape_cast %76 : vector<1x1x256xf32> to vector<1x256xf32>
    %78 = vector.broadcast %77 : vector<1x256xf32> to vector<8x256xf32>
    %79 = arith.mulf %75, %78 : vector<8x256xf32>
    %c241_i32_48 = arith.constant 241 : i32
    %80 = tpu.dynamic_rotate %54 by %c241_i32_48 dim 1 : vector<8x256xf32>, i32 -> vector<8x256xf32>
    %c6_49 = arith.constant 6 : index
    %c0_50 = arith.constant 0 : index
    %c0_51 = arith.constant 0 : index
    %81 = vector.load %arg3[%c6_49, %c0_50, %c0_51] : memref<9x1x256xf32, #tpu.memory_space<vmem>>, vector<1x1x256xf32>
    %82 = vector.shape_cast %81 : vector<1x1x256xf32> to vector<1x256xf32>
    %83 = vector.broadcast %82 : vector<1x256xf32> to vector<8x256xf32>
    %84 = arith.mulf %80, %83 : vector<8x256xf32>
    %c240_i32_52 = arith.constant 240 : i32
    %85 = tpu.dynamic_rotate %54 by %c240_i32_52 dim 1 : vector<8x256xf32>, i32 -> vector<8x256xf32>
    %c7_53 = arith.constant 7 : index
    %c0_54 = arith.constant 0 : index
    %c0_55 = arith.constant 0 : index
    %86 = vector.load %arg3[%c7_53, %c0_54, %c0_55] : memref<9x1x256xf32, #tpu.memory_space<vmem>>, vector<1x1x256xf32>
    %87 = vector.shape_cast %86 : vector<1x1x256xf32> to vector<1x256xf32>
    %88 = vector.broadcast %87 : vector<1x256xf32> to vector<8x256xf32>
    %89 = arith.mulf %85, %88 : vector<8x256xf32>
    %c239_i32_56 = arith.constant 239 : i32
    %90 = tpu.dynamic_rotate %54 by %c239_i32_56 dim 1 : vector<8x256xf32>, i32 -> vector<8x256xf32>
    %c8_57 = arith.constant 8 : index
    %c0_58 = arith.constant 0 : index
    %c0_59 = arith.constant 0 : index
    %91 = vector.load %arg3[%c8_57, %c0_58, %c0_59] : memref<9x1x256xf32, #tpu.memory_space<vmem>>, vector<1x1x256xf32>
    %92 = vector.shape_cast %91 : vector<1x1x256xf32> to vector<1x256xf32>
    %93 = vector.broadcast %92 : vector<1x256xf32> to vector<8x256xf32>
    %94 = arith.mulf %90, %93 : vector<8x256xf32>
    %95 = tpu.concatenate %59, %64, %69, %74, %54, %79, %84, %89, %94 in 0 : vector<8x256xf32>, vector<8x256xf32>, vector<8x256xf32>, vector<8x256xf32>, vector<8x256xf32>, vector<8x256xf32>, vector<8x256xf32>, vector<8x256xf32>, vector<8x256xf32> -> vector<72x256xf32>
    %c0_60 = arith.constant 0 : index
    %c0_61 = arith.constant 0 : index
    %96 = vector.load %arg6[%c0_60, %c0_61] : memref<8x72xf32, #tpu.memory_space<vmem>>, vector<8x72xf32>
    %cst_62 = arith.constant dense<0.000000e+00> : vector<8x256xf32>
    %97 = tpu.matmul %96, %95, %cst_62 {dimension_numbers = #tpu.dot_dimension_numbers<[1], [0], [0], [1], [0, 0, 1, 1], [], []>} : vector<8x72xf32>, vector<72x256xf32>, vector<8x256xf32> -> vector<8x256xf32>
    %c0_63 = arith.constant 0 : index
    %c0_64 = arith.constant 0 : index
    %98 = vector.load %arg7[%c0_63, %c0_64] : memref<8x1xf32, #tpu.memory_space<vmem>>, vector<8x1xf32>
    %99 = vector.broadcast %98 : vector<8x1xf32> to vector<8x256xf32>
    %100 = arith.addf %97, %99 : vector<8x256xf32>
    %c17_i32_65 = arith.constant 17 : i32
    %101 = tpu.dynamic_rotate %3 by %c17_i32_65 dim 1 : vector<8x256xf32>, i32 -> vector<8x256xf32>
    %c0_66 = arith.constant 0 : index
    %c0_67 = arith.constant 0 : index
    %c0_68 = arith.constant 0 : index
    %102 = vector.load %arg3[%c0_66, %c0_67, %c0_68] : memref<9x1x256xf32, #tpu.memory_space<vmem>>, vector<1x1x256xf32>
    %103 = vector.shape_cast %102 : vector<1x1x256xf32> to vector<1x256xf32>
    %104 = vector.broadcast %103 : vector<1x256xf32> to vector<8x256xf32>
    %105 = arith.mulf %101, %104 : vector<8x256xf32>
    %c16_i32_69 = arith.constant 16 : i32
    %106 = tpu.dynamic_rotate %3 by %c16_i32_69 dim 1 : vector<8x256xf32>, i32 -> vector<8x256xf32>
    %c1_70 = arith.constant 1 : index
    %c0_71 = arith.constant 0 : index
    %c0_72 = arith.constant 0 : index
    %107 = vector.load %arg3[%c1_70, %c0_71, %c0_72] : memref<9x1x256xf32, #tpu.memory_space<vmem>>, vector<1x1x256xf32>
    %108 = vector.shape_cast %107 : vector<1x1x256xf32> to vector<1x256xf32>
    %109 = vector.broadcast %108 : vector<1x256xf32> to vector<8x256xf32>
    %110 = arith.mulf %106, %109 : vector<8x256xf32>
    %c15_i32_73 = arith.constant 15 : i32
    %111 = tpu.dynamic_rotate %3 by %c15_i32_73 dim 1 : vector<8x256xf32>, i32 -> vector<8x256xf32>
    %c2_74 = arith.constant 2 : index
    %c0_75 = arith.constant 0 : index
    %c0_76 = arith.constant 0 : index
    %112 = vector.load %arg3[%c2_74, %c0_75, %c0_76] : memref<9x1x256xf32, #tpu.memory_space<vmem>>, vector<1x1x256xf32>
    %113 = vector.shape_cast %112 : vector<1x1x256xf32> to vector<1x256xf32>
    %114 = vector.broadcast %113 : vector<1x256xf32> to vector<8x256xf32>
    %115 = arith.mulf %111, %114 : vector<8x256xf32>
    %c1_i32_77 = arith.constant 1 : i32
    %116 = tpu.dynamic_rotate %3 by %c1_i32_77 dim 1 : vector<8x256xf32>, i32 -> vector<8x256xf32>
    %c3_78 = arith.constant 3 : index
    %c0_79 = arith.constant 0 : index
    %c0_80 = arith.constant 0 : index
    %117 = vector.load %arg3[%c3_78, %c0_79, %c0_80] : memref<9x1x256xf32, #tpu.memory_space<vmem>>, vector<1x1x256xf32>
    %118 = vector.shape_cast %117 : vector<1x1x256xf32> to vector<1x256xf32>
    %119 = vector.broadcast %118 : vector<1x256xf32> to vector<8x256xf32>
    %120 = arith.mulf %116, %119 : vector<8x256xf32>
    %c255_i32_81 = arith.constant 255 : i32
    %121 = tpu.dynamic_rotate %3 by %c255_i32_81 dim 1 : vector<8x256xf32>, i32 -> vector<8x256xf32>
    %c5_82 = arith.constant 5 : index
    %c0_83 = arith.constant 0 : index
    %c0_84 = arith.constant 0 : index
    %122 = vector.load %arg3[%c5_82, %c0_83, %c0_84] : memref<9x1x256xf32, #tpu.memory_space<vmem>>, vector<1x1x256xf32>
    %123 = vector.shape_cast %122 : vector<1x1x256xf32> to vector<1x256xf32>
    %124 = vector.broadcast %123 : vector<1x256xf32> to vector<8x256xf32>
    %125 = arith.mulf %121, %124 : vector<8x256xf32>
    %c241_i32_85 = arith.constant 241 : i32
    %126 = tpu.dynamic_rotate %3 by %c241_i32_85 dim 1 : vector<8x256xf32>, i32 -> vector<8x256xf32>
    %c6_86 = arith.constant 6 : index
    %c0_87 = arith.constant 0 : index
    %c0_88 = arith.constant 0 : index
    %127 = vector.load %arg3[%c6_86, %c0_87, %c0_88] : memref<9x1x256xf32, #tpu.memory_space<vmem>>, vector<1x1x256xf32>
    %128 = vector.shape_cast %127 : vector<1x1x256xf32> to vector<1x256xf32>
    %129 = vector.broadcast %128 : vector<1x256xf32> to vector<8x256xf32>
    %130 = arith.mulf %126, %129 : vector<8x256xf32>
    %c240_i32_89 = arith.constant 240 : i32
    %131 = tpu.dynamic_rotate %3 by %c240_i32_89 dim 1 : vector<8x256xf32>, i32 -> vector<8x256xf32>
    %c7_90 = arith.constant 7 : index
    %c0_91 = arith.constant 0 : index
    %c0_92 = arith.constant 0 : index
    %132 = vector.load %arg3[%c7_90, %c0_91, %c0_92] : memref<9x1x256xf32, #tpu.memory_space<vmem>>, vector<1x1x256xf32>
    %133 = vector.shape_cast %132 : vector<1x1x256xf32> to vector<1x256xf32>
    %134 = vector.broadcast %133 : vector<1x256xf32> to vector<8x256xf32>
    %135 = arith.mulf %131, %134 : vector<8x256xf32>
    %c239_i32_93 = arith.constant 239 : i32
    %136 = tpu.dynamic_rotate %3 by %c239_i32_93 dim 1 : vector<8x256xf32>, i32 -> vector<8x256xf32>
    %c8_94 = arith.constant 8 : index
    %c0_95 = arith.constant 0 : index
    %c0_96 = arith.constant 0 : index
    %137 = vector.load %arg3[%c8_94, %c0_95, %c0_96] : memref<9x1x256xf32, #tpu.memory_space<vmem>>, vector<1x1x256xf32>
    %138 = vector.shape_cast %137 : vector<1x1x256xf32> to vector<1x256xf32>
    %139 = vector.broadcast %138 : vector<1x256xf32> to vector<8x256xf32>
    %140 = arith.mulf %136, %139 : vector<8x256xf32>
    %141 = tpu.concatenate %105, %110, %115, %120, %3, %125, %130, %135, %140 in 0 : vector<8x256xf32>, vector<8x256xf32>, vector<8x256xf32>, vector<8x256xf32>, vector<8x256xf32>, vector<8x256xf32>, vector<8x256xf32>, vector<8x256xf32>, vector<8x256xf32> -> vector<72x256xf32>
    %c0_97 = arith.constant 0 : index
    %c0_98 = arith.constant 0 : index
    %142 = vector.load %arg8[%c0_97, %c0_98] : memref<8x72xf32, #tpu.memory_space<vmem>>, vector<8x72xf32>
    %cst_99 = arith.constant dense<0.000000e+00> : vector<8x256xf32>
    %143 = tpu.matmul %142, %141, %cst_99 {dimension_numbers = #tpu.dot_dimension_numbers<[1], [0], [0], [1], [0, 0, 1, 1], [], []>} : vector<8x72xf32>, vector<72x256xf32>, vector<8x256xf32> -> vector<8x256xf32>
    %c0_100 = arith.constant 0 : index
    %c0_101 = arith.constant 0 : index
    %144 = vector.load %arg9[%c0_100, %c0_101] : memref<8x1xf32, #tpu.memory_space<vmem>>, vector<8x1xf32>
    %145 = vector.broadcast %144 : vector<8x1xf32> to vector<8x256xf32>
    %146 = arith.addf %143, %145 : vector<8x256xf32>
    %cst_102 = arith.constant 0.000000e+00 : f32
    %147 = vector.broadcast %cst_102 : f32 to vector<8x256xf32>
    %148 = arith.cmpf oge, %146, %147 : vector<8x256xf32>
    %cst_103 = arith.constant 1.000000e-01 : f32
    %149 = vector.broadcast %cst_103 : f32 to vector<8x256xf32>
    %150 = arith.mulf %149, %146 : vector<8x256xf32>
    %151 = arith.select %148, %146, %150 : vector<8x256xi1>, vector<8x256xf32>
    %c17_i32_104 = arith.constant 17 : i32
    %152 = tpu.dynamic_rotate %151 by %c17_i32_104 dim 1 : vector<8x256xf32>, i32 -> vector<8x256xf32>
    %c0_105 = arith.constant 0 : index
    %c0_106 = arith.constant 0 : index
    %c0_107 = arith.constant 0 : index
    %153 = vector.load %arg3[%c0_105, %c0_106, %c0_107] : memref<9x1x256xf32, #tpu.memory_space<vmem>>, vector<1x1x256xf32>
    %154 = vector.shape_cast %153 : vector<1x1x256xf32> to vector<1x256xf32>
    %155 = vector.broadcast %154 : vector<1x256xf32> to vector<8x256xf32>
    %156 = arith.mulf %152, %155 : vector<8x256xf32>
    %c16_i32_108 = arith.constant 16 : i32
    %157 = tpu.dynamic_rotate %151 by %c16_i32_108 dim 1 : vector<8x256xf32>, i32 -> vector<8x256xf32>
    %c1_109 = arith.constant 1 : index
    %c0_110 = arith.constant 0 : index
    %c0_111 = arith.constant 0 : index
    %158 = vector.load %arg3[%c1_109, %c0_110, %c0_111] : memref<9x1x256xf32, #tpu.memory_space<vmem>>, vector<1x1x256xf32>
    %159 = vector.shape_cast %158 : vector<1x1x256xf32> to vector<1x256xf32>
    %160 = vector.broadcast %159 : vector<1x256xf32> to vector<8x256xf32>
    %161 = arith.mulf %157, %160 : vector<8x256xf32>
    %c15_i32_112 = arith.constant 15 : i32
    %162 = tpu.dynamic_rotate %151 by %c15_i32_112 dim 1 : vector<8x256xf32>, i32 -> vector<8x256xf32>
    %c2_113 = arith.constant 2 : index
    %c0_114 = arith.constant 0 : index
    %c0_115 = arith.constant 0 : index
    %163 = vector.load %arg3[%c2_113, %c0_114, %c0_115] : memref<9x1x256xf32, #tpu.memory_space<vmem>>, vector<1x1x256xf32>
    %164 = vector.shape_cast %163 : vector<1x1x256xf32> to vector<1x256xf32>
    %165 = vector.broadcast %164 : vector<1x256xf32> to vector<8x256xf32>
    %166 = arith.mulf %162, %165 : vector<8x256xf32>
    %c1_i32_116 = arith.constant 1 : i32
    %167 = tpu.dynamic_rotate %151 by %c1_i32_116 dim 1 : vector<8x256xf32>, i32 -> vector<8x256xf32>
    %c3_117 = arith.constant 3 : index
    %c0_118 = arith.constant 0 : index
    %c0_119 = arith.constant 0 : index
    %168 = vector.load %arg3[%c3_117, %c0_118, %c0_119] : memref<9x1x256xf32, #tpu.memory_space<vmem>>, vector<1x1x256xf32>
    %169 = vector.shape_cast %168 : vector<1x1x256xf32> to vector<1x256xf32>
    %170 = vector.broadcast %169 : vector<1x256xf32> to vector<8x256xf32>
    %171 = arith.mulf %167, %170 : vector<8x256xf32>
    %c255_i32_120 = arith.constant 255 : i32
    %172 = tpu.dynamic_rotate %151 by %c255_i32_120 dim 1 : vector<8x256xf32>, i32 -> vector<8x256xf32>
    %c5_121 = arith.constant 5 : index
    %c0_122 = arith.constant 0 : index
    %c0_123 = arith.constant 0 : index
    %173 = vector.load %arg3[%c5_121, %c0_122, %c0_123] : memref<9x1x256xf32, #tpu.memory_space<vmem>>, vector<1x1x256xf32>
    %174 = vector.shape_cast %173 : vector<1x1x256xf32> to vector<1x256xf32>
    %175 = vector.broadcast %174 : vector<1x256xf32> to vector<8x256xf32>
    %176 = arith.mulf %172, %175 : vector<8x256xf32>
    %c241_i32_124 = arith.constant 241 : i32
    %177 = tpu.dynamic_rotate %151 by %c241_i32_124 dim 1 : vector<8x256xf32>, i32 -> vector<8x256xf32>
    %c6_125 = arith.constant 6 : index
    %c0_126 = arith.constant 0 : index
    %c0_127 = arith.constant 0 : index
    %178 = vector.load %arg3[%c6_125, %c0_126, %c0_127] : memref<9x1x256xf32, #tpu.memory_space<vmem>>, vector<1x1x256xf32>
    %179 = vector.shape_cast %178 : vector<1x1x256xf32> to vector<1x256xf32>
    %180 = vector.broadcast %179 : vector<1x256xf32> to vector<8x256xf32>
    %181 = arith.mulf %177, %180 : vector<8x256xf32>
    %c240_i32_128 = arith.constant 240 : i32
    %182 = tpu.dynamic_rotate %151 by %c240_i32_128 dim 1 : vector<8x256xf32>, i32 -> vector<8x256xf32>
    %c7_129 = arith.constant 7 : index
    %c0_130 = arith.constant 0 : index
    %c0_131 = arith.constant 0 : index
    %183 = vector.load %arg3[%c7_129, %c0_130, %c0_131] : memref<9x1x256xf32, #tpu.memory_space<vmem>>, vector<1x1x256xf32>
    %184 = vector.shape_cast %183 : vector<1x1x256xf32> to vector<1x256xf32>
    %185 = vector.broadcast %184 : vector<1x256xf32> to vector<8x256xf32>
    %186 = arith.mulf %182, %185 : vector<8x256xf32>
    %c239_i32_132 = arith.constant 239 : i32
    %187 = tpu.dynamic_rotate %151 by %c239_i32_132 dim 1 : vector<8x256xf32>, i32 -> vector<8x256xf32>
    %c8_133 = arith.constant 8 : index
    %c0_134 = arith.constant 0 : index
    %c0_135 = arith.constant 0 : index
    %188 = vector.load %arg3[%c8_133, %c0_134, %c0_135] : memref<9x1x256xf32, #tpu.memory_space<vmem>>, vector<1x1x256xf32>
    %189 = vector.shape_cast %188 : vector<1x1x256xf32> to vector<1x256xf32>
    %190 = vector.broadcast %189 : vector<1x256xf32> to vector<8x256xf32>
    %191 = arith.mulf %187, %190 : vector<8x256xf32>
    %192 = tpu.concatenate %156, %161, %166, %171, %151, %176, %181, %186, %191 in 0 : vector<8x256xf32>, vector<8x256xf32>, vector<8x256xf32>, vector<8x256xf32>, vector<8x256xf32>, vector<8x256xf32>, vector<8x256xf32>, vector<8x256xf32>, vector<8x256xf32> -> vector<72x256xf32>
    %c0_136 = arith.constant 0 : index
    %c0_137 = arith.constant 0 : index
    %193 = vector.load %arg10[%c0_136, %c0_137] : memref<8x72xf32, #tpu.memory_space<vmem>>, vector<8x72xf32>
    %cst_138 = arith.constant dense<0.000000e+00> : vector<8x256xf32>
    %194 = tpu.matmul %193, %192, %cst_138 {dimension_numbers = #tpu.dot_dimension_numbers<[1], [0], [0], [1], [0, 0, 1, 1], [], []>} : vector<8x72xf32>, vector<72x256xf32>, vector<8x256xf32> -> vector<8x256xf32>
    %c0_139 = arith.constant 0 : index
    %c0_140 = arith.constant 0 : index
    %195 = vector.load %arg11[%c0_139, %c0_140] : memref<8x1xf32, #tpu.memory_space<vmem>>, vector<8x1xf32>
    %196 = vector.broadcast %195 : vector<8x1xf32> to vector<8x256xf32>
    %197 = arith.addf %194, %196 : vector<8x256xf32>
    %cst_141 = arith.constant 0.000000e+00 : f32
    %198 = vector.broadcast %cst_141 : f32 to vector<8x256xf32>
    %199 = arith.cmpf oge, %100, %198 : vector<8x256xf32>
    %cst_142 = arith.constant 1.000000e-01 : f32
    %200 = vector.broadcast %cst_142 : f32 to vector<8x256xf32>
    %201 = arith.mulf %200, %100 : vector<8x256xf32>
    %202 = arith.select %199, %100, %201 : vector<8x256xi1>, vector<8x256xf32>
    %c17_i32_143 = arith.constant 17 : i32
    %203 = tpu.dynamic_rotate %202 by %c17_i32_143 dim 1 : vector<8x256xf32>, i32 -> vector<8x256xf32>
    %c0_144 = arith.constant 0 : index
    %c0_145 = arith.constant 0 : index
    %c0_146 = arith.constant 0 : index
    %204 = vector.load %arg3[%c0_144, %c0_145, %c0_146] : memref<9x1x256xf32, #tpu.memory_space<vmem>>, vector<1x1x256xf32>
    %205 = vector.shape_cast %204 : vector<1x1x256xf32> to vector<1x256xf32>
    %206 = vector.broadcast %205 : vector<1x256xf32> to vector<8x256xf32>
    %207 = arith.mulf %203, %206 : vector<8x256xf32>
    %c16_i32_147 = arith.constant 16 : i32
    %208 = tpu.dynamic_rotate %202 by %c16_i32_147 dim 1 : vector<8x256xf32>, i32 -> vector<8x256xf32>
    %c1_148 = arith.constant 1 : index
    %c0_149 = arith.constant 0 : index
    %c0_150 = arith.constant 0 : index
    %209 = vector.load %arg3[%c1_148, %c0_149, %c0_150] : memref<9x1x256xf32, #tpu.memory_space<vmem>>, vector<1x1x256xf32>
    %210 = vector.shape_cast %209 : vector<1x1x256xf32> to vector<1x256xf32>
    %211 = vector.broadcast %210 : vector<1x256xf32> to vector<8x256xf32>
    %212 = arith.mulf %208, %211 : vector<8x256xf32>
    %c15_i32_151 = arith.constant 15 : i32
    %213 = tpu.dynamic_rotate %202 by %c15_i32_151 dim 1 : vector<8x256xf32>, i32 -> vector<8x256xf32>
    %c2_152 = arith.constant 2 : index
    %c0_153 = arith.constant 0 : index
    %c0_154 = arith.constant 0 : index
    %214 = vector.load %arg3[%c2_152, %c0_153, %c0_154] : memref<9x1x256xf32, #tpu.memory_space<vmem>>, vector<1x1x256xf32>
    %215 = vector.shape_cast %214 : vector<1x1x256xf32> to vector<1x256xf32>
    %216 = vector.broadcast %215 : vector<1x256xf32> to vector<8x256xf32>
    %217 = arith.mulf %213, %216 : vector<8x256xf32>
    %c1_i32_155 = arith.constant 1 : i32
    %218 = tpu.dynamic_rotate %202 by %c1_i32_155 dim 1 : vector<8x256xf32>, i32 -> vector<8x256xf32>
    %c3_156 = arith.constant 3 : index
    %c0_157 = arith.constant 0 : index
    %c0_158 = arith.constant 0 : index
    %219 = vector.load %arg3[%c3_156, %c0_157, %c0_158] : memref<9x1x256xf32, #tpu.memory_space<vmem>>, vector<1x1x256xf32>
    %220 = vector.shape_cast %219 : vector<1x1x256xf32> to vector<1x256xf32>
    %221 = vector.broadcast %220 : vector<1x256xf32> to vector<8x256xf32>
    %222 = arith.mulf %218, %221 : vector<8x256xf32>
    %c255_i32_159 = arith.constant 255 : i32
    %223 = tpu.dynamic_rotate %202 by %c255_i32_159 dim 1 : vector<8x256xf32>, i32 -> vector<8x256xf32>
    %c5_160 = arith.constant 5 : index
    %c0_161 = arith.constant 0 : index
    %c0_162 = arith.constant 0 : index
    %224 = vector.load %arg3[%c5_160, %c0_161, %c0_162] : memref<9x1x256xf32, #tpu.memory_space<vmem>>, vector<1x1x256xf32>
    %225 = vector.shape_cast %224 : vector<1x1x256xf32> to vector<1x256xf32>
    %226 = vector.broadcast %225 : vector<1x256xf32> to vector<8x256xf32>
    %227 = arith.mulf %223, %226 : vector<8x256xf32>
    %c241_i32_163 = arith.constant 241 : i32
    %228 = tpu.dynamic_rotate %202 by %c241_i32_163 dim 1 : vector<8x256xf32>, i32 -> vector<8x256xf32>
    %c6_164 = arith.constant 6 : index
    %c0_165 = arith.constant 0 : index
    %c0_166 = arith.constant 0 : index
    %229 = vector.load %arg3[%c6_164, %c0_165, %c0_166] : memref<9x1x256xf32, #tpu.memory_space<vmem>>, vector<1x1x256xf32>
    %230 = vector.shape_cast %229 : vector<1x1x256xf32> to vector<1x256xf32>
    %231 = vector.broadcast %230 : vector<1x256xf32> to vector<8x256xf32>
    %232 = arith.mulf %228, %231 : vector<8x256xf32>
    %c240_i32_167 = arith.constant 240 : i32
    %233 = tpu.dynamic_rotate %202 by %c240_i32_167 dim 1 : vector<8x256xf32>, i32 -> vector<8x256xf32>
    %c7_168 = arith.constant 7 : index
    %c0_169 = arith.constant 0 : index
    %c0_170 = arith.constant 0 : index
    %234 = vector.load %arg3[%c7_168, %c0_169, %c0_170] : memref<9x1x256xf32, #tpu.memory_space<vmem>>, vector<1x1x256xf32>
    %235 = vector.shape_cast %234 : vector<1x1x256xf32> to vector<1x256xf32>
    %236 = vector.broadcast %235 : vector<1x256xf32> to vector<8x256xf32>
    %237 = arith.mulf %233, %236 : vector<8x256xf32>
    %c239_i32_171 = arith.constant 239 : i32
    %238 = tpu.dynamic_rotate %202 by %c239_i32_171 dim 1 : vector<8x256xf32>, i32 -> vector<8x256xf32>
    %c8_172 = arith.constant 8 : index
    %c0_173 = arith.constant 0 : index
    %c0_174 = arith.constant 0 : index
    %239 = vector.load %arg3[%c8_172, %c0_173, %c0_174] : memref<9x1x256xf32, #tpu.memory_space<vmem>>, vector<1x1x256xf32>
    %240 = vector.shape_cast %239 : vector<1x1x256xf32> to vector<1x256xf32>
    %241 = vector.broadcast %240 : vector<1x256xf32> to vector<8x256xf32>
    %242 = arith.mulf %238, %241 : vector<8x256xf32>
    %cst_175 = arith.constant 0.000000e+00 : f32
    %243 = vector.broadcast %cst_175 : f32 to vector<8x256xf32>
    %244 = arith.cmpf oge, %197, %243 : vector<8x256xf32>
    %cst_176 = arith.constant 1.000000e-01 : f32
    %245 = vector.broadcast %cst_176 : f32 to vector<8x256xf32>
    %246 = arith.mulf %245, %197 : vector<8x256xf32>
    %247 = arith.select %244, %197, %246 : vector<8x256xi1>, vector<8x256xf32>
    %c17_i32_177 = arith.constant 17 : i32
    %248 = tpu.dynamic_rotate %247 by %c17_i32_177 dim 1 : vector<8x256xf32>, i32 -> vector<8x256xf32>
    %c0_178 = arith.constant 0 : index
    %c0_179 = arith.constant 0 : index
    %c0_180 = arith.constant 0 : index
    %249 = vector.load %arg3[%c0_178, %c0_179, %c0_180] : memref<9x1x256xf32, #tpu.memory_space<vmem>>, vector<1x1x256xf32>
    %250 = vector.shape_cast %249 : vector<1x1x256xf32> to vector<1x256xf32>
    %251 = vector.broadcast %250 : vector<1x256xf32> to vector<8x256xf32>
    %252 = arith.mulf %248, %251 : vector<8x256xf32>
    %c16_i32_181 = arith.constant 16 : i32
    %253 = tpu.dynamic_rotate %247 by %c16_i32_181 dim 1 : vector<8x256xf32>, i32 -> vector<8x256xf32>
    %c1_182 = arith.constant 1 : index
    %c0_183 = arith.constant 0 : index
    %c0_184 = arith.constant 0 : index
    %254 = vector.load %arg3[%c1_182, %c0_183, %c0_184] : memref<9x1x256xf32, #tpu.memory_space<vmem>>, vector<1x1x256xf32>
    %255 = vector.shape_cast %254 : vector<1x1x256xf32> to vector<1x256xf32>
    %256 = vector.broadcast %255 : vector<1x256xf32> to vector<8x256xf32>
    %257 = arith.mulf %253, %256 : vector<8x256xf32>
    %c15_i32_185 = arith.constant 15 : i32
    %258 = tpu.dynamic_rotate %247 by %c15_i32_185 dim 1 : vector<8x256xf32>, i32 -> vector<8x256xf32>
    %c2_186 = arith.constant 2 : index
    %c0_187 = arith.constant 0 : index
    %c0_188 = arith.constant 0 : index
    %259 = vector.load %arg3[%c2_186, %c0_187, %c0_188] : memref<9x1x256xf32, #tpu.memory_space<vmem>>, vector<1x1x256xf32>
    %260 = vector.shape_cast %259 : vector<1x1x256xf32> to vector<1x256xf32>
    %261 = vector.broadcast %260 : vector<1x256xf32> to vector<8x256xf32>
    %262 = arith.mulf %258, %261 : vector<8x256xf32>
    %c1_i32_189 = arith.constant 1 : i32
    %263 = tpu.dynamic_rotate %247 by %c1_i32_189 dim 1 : vector<8x256xf32>, i32 -> vector<8x256xf32>
    %c3_190 = arith.constant 3 : index
    %c0_191 = arith.constant 0 : index
    %c0_192 = arith.constant 0 : index
    %264 = vector.load %arg3[%c3_190, %c0_191, %c0_192] : memref<9x1x256xf32, #tpu.memory_space<vmem>>, vector<1x1x256xf32>
    %265 = vector.shape_cast %264 : vector<1x1x256xf32> to vector<1x256xf32>
    %266 = vector.broadcast %265 : vector<1x256xf32> to vector<8x256xf32>
    %267 = arith.mulf %263, %266 : vector<8x256xf32>
    %c255_i32_193 = arith.constant 255 : i32
    %268 = tpu.dynamic_rotate %247 by %c255_i32_193 dim 1 : vector<8x256xf32>, i32 -> vector<8x256xf32>
    %c5_194 = arith.constant 5 : index
    %c0_195 = arith.constant 0 : index
    %c0_196 = arith.constant 0 : index
    %269 = vector.load %arg3[%c5_194, %c0_195, %c0_196] : memref<9x1x256xf32, #tpu.memory_space<vmem>>, vector<1x1x256xf32>
    %270 = vector.shape_cast %269 : vector<1x1x256xf32> to vector<1x256xf32>
    %271 = vector.broadcast %270 : vector<1x256xf32> to vector<8x256xf32>
    %272 = arith.mulf %268, %271 : vector<8x256xf32>
    %c241_i32_197 = arith.constant 241 : i32
    %273 = tpu.dynamic_rotate %247 by %c241_i32_197 dim 1 : vector<8x256xf32>, i32 -> vector<8x256xf32>
    %c6_198 = arith.constant 6 : index
    %c0_199 = arith.constant 0 : index
    %c0_200 = arith.constant 0 : index
    %274 = vector.load %arg3[%c6_198, %c0_199, %c0_200] : memref<9x1x256xf32, #tpu.memory_space<vmem>>, vector<1x1x256xf32>
    %275 = vector.shape_cast %274 : vector<1x1x256xf32> to vector<1x256xf32>
    %276 = vector.broadcast %275 : vector<1x256xf32> to vector<8x256xf32>
    %277 = arith.mulf %273, %276 : vector<8x256xf32>
    %c240_i32_201 = arith.constant 240 : i32
    %278 = tpu.dynamic_rotate %247 by %c240_i32_201 dim 1 : vector<8x256xf32>, i32 -> vector<8x256xf32>
    %c7_202 = arith.constant 7 : index
    %c0_203 = arith.constant 0 : index
    %c0_204 = arith.constant 0 : index
    %279 = vector.load %arg3[%c7_202, %c0_203, %c0_204] : memref<9x1x256xf32, #tpu.memory_space<vmem>>, vector<1x1x256xf32>
    %280 = vector.shape_cast %279 : vector<1x1x256xf32> to vector<1x256xf32>
    %281 = vector.broadcast %280 : vector<1x256xf32> to vector<8x256xf32>
    %282 = arith.mulf %278, %281 : vector<8x256xf32>
    %c239_i32_205 = arith.constant 239 : i32
    %283 = tpu.dynamic_rotate %247 by %c239_i32_205 dim 1 : vector<8x256xf32>, i32 -> vector<8x256xf32>
    %c8_206 = arith.constant 8 : index
    %c0_207 = arith.constant 0 : index
    %c0_208 = arith.constant 0 : index
    %284 = vector.load %arg3[%c8_206, %c0_207, %c0_208] : memref<9x1x256xf32, #tpu.memory_space<vmem>>, vector<1x1x256xf32>
    %285 = vector.shape_cast %284 : vector<1x1x256xf32> to vector<1x256xf32>
    %286 = vector.broadcast %285 : vector<1x256xf32> to vector<8x256xf32>
    %287 = arith.mulf %283, %286 : vector<8x256xf32>
    %288 = tpu.concatenate %207, %212, %217, %222, %202, %227, %232, %237, %242, %252, %257, %262, %267, %247, %272, %277 in 0 : vector<8x256xf32>, vector<8x256xf32>, vector<8x256xf32>, vector<8x256xf32>, vector<8x256xf32>, vector<8x256xf32>, vector<8x256xf32>, vector<8x256xf32>, vector<8x256xf32>, vector<8x256xf32>, vector<8x256xf32>, vector<8x256xf32>, vector<8x256xf32>, vector<8x256xf32>, vector<8x256xf32>, vector<8x256xf32> -> vector<128x256xf32>
    %289 = tpu.concatenate %282, %287 in 0 : vector<8x256xf32>, vector<8x256xf32> -> vector<16x256xf32>
    %290 = tpu.concatenate %288, %289 in 0 : vector<128x256xf32>, vector<16x256xf32> -> vector<144x256xf32>
    %c0_209 = arith.constant 0 : index
    %c0_210 = arith.constant 0 : index
    %291 = vector.load %arg12[%c0_209, %c0_210] : memref<8x144xf32, #tpu.memory_space<vmem>>, vector<8x144xf32>
    %cst_211 = arith.constant dense<0.000000e+00> : vector<8x256xf32>
    %292 = tpu.matmul %291, %290, %cst_211 {dimension_numbers = #tpu.dot_dimension_numbers<[1], [0], [0], [1], [0, 0, 1, 1], [], []>} : vector<8x144xf32>, vector<144x256xf32>, vector<8x256xf32> -> vector<8x256xf32>
    %c0_212 = arith.constant 0 : index
    %c0_213 = arith.constant 0 : index
    %293 = vector.load %arg13[%c0_212, %c0_213] : memref<8x1xf32, #tpu.memory_space<vmem>>, vector<8x1xf32>
    %294 = vector.broadcast %293 : vector<8x1xf32> to vector<8x256xf32>
    %295 = arith.addf %292, %294 : vector<8x256xf32>
    %cst_214 = arith.constant dense<0.000000e+00> : vector<8xf32>
    %296 = vector.multi_reduction <add>, %295, %cst_214 [1] : vector<8x256xf32> to vector<8xf32>
    %297 = vector.shape_cast %296 : vector<8xf32> to vector<8x1xf32>
    %cst_215 = arith.constant 3.906250e-03 : f32
    %298 = vector.broadcast %cst_215 : f32 to vector<8x1xf32>
    %299 = arith.mulf %297, %298 : vector<8x1xf32>
    %c0_216 = arith.constant 0 : index
    %c0_217 = arith.constant 0 : index
    %300 = vector.load %arg14[%c0_216, %c0_217] : memref<8x2xf32, #tpu.memory_space<vmem>>, vector<8x2xf32>
    %301 = vector.broadcast %299 : vector<8x1xf32> to vector<8x2xf32>
    %302 = arith.mulf %300, %301 : vector<8x2xf32>
    %cst_218 = arith.constant dense<0.000000e+00> : vector<2xf32>
    %303 = vector.multi_reduction <add>, %302, %cst_218 [0] : vector<8x2xf32> to vector<2xf32>
    %304 = vector.shape_cast %303 : vector<2xf32> to vector<1x2xf32>
    %c0_219 = arith.constant 0 : index
    %c0_220 = arith.constant 0 : index
    %305 = vector.load %arg15[%c0_219, %c0_220] : memref<1x2xf32, #tpu.memory_space<vmem>>, vector<1x2xf32>
    %306 = arith.addf %304, %305 : vector<1x2xf32>
    %cst_221 = arith.constant 0.000000e+00 : f32
    %307 = vector.broadcast %cst_221 : f32 to vector<1x2xf32>
    %308 = arith.maximumf %306, %307 : vector<1x2xf32>
    %c0_222 = arith.constant 0 : index
    %c0_223 = arith.constant 0 : index
    %309 = vector.load %arg16[%c0_222, %c0_223] : memref<8x2xf32, #tpu.memory_space<vmem>>, vector<8x2xf32>
    %310 = vector.broadcast %308 : vector<1x2xf32> to vector<8x2xf32>
    %311 = arith.mulf %309, %310 : vector<8x2xf32>
    %cst_224 = arith.constant dense<0.000000e+00> : vector<8xf32>
    %312 = vector.multi_reduction <add>, %311, %cst_224 [1] : vector<8x2xf32> to vector<8xf32>
    %313 = vector.shape_cast %312 : vector<8xf32> to vector<8x1xf32>
    %c0_225 = arith.constant 0 : index
    %c0_226 = arith.constant 0 : index
    %314 = vector.load %arg17[%c0_225, %c0_226] : memref<8x1xf32, #tpu.memory_space<vmem>>, vector<8x1xf32>
    %315 = arith.addf %313, %314 : vector<8x1xf32>
    %cst_227 = arith.constant 0.000000e+00 : f32
    %316 = vector.broadcast %cst_227 : f32 to vector<8x1xf32>
    %317 = arith.subf %316, %315 : vector<8x1xf32>
    %318 = math.exp %317 : vector<8x1xf32>
    %cst_228 = arith.constant 1.000000e+00 : f32
    %319 = vector.broadcast %cst_228 : f32 to vector<8x1xf32>
    %320 = arith.addf %319, %318 : vector<8x1xf32>
    %cst_229 = arith.constant 1.000000e+00 : f32
    %321 = vector.broadcast %cst_229 : f32 to vector<8x1xf32>
    %322 = arith.divf %321, %320 : vector<8x1xf32>
    %323 = vector.broadcast %322 : vector<8x1xf32> to vector<8x256xf32>
    %324 = arith.mulf %295, %323 : vector<8x256xf32>
    %325 = arith.addf %1, %324 : vector<8x256xf32>
    %cst_230 = arith.constant dense<0.000000e+00> : vector<8xf32>
    %326 = vector.multi_reduction <add>, %197, %cst_230 [1] : vector<8x256xf32> to vector<8xf32>
    %327 = vector.shape_cast %326 : vector<8xf32> to vector<8x1xf32>
    %cst_231 = arith.constant 3.906250e-03 : f32
    %328 = vector.broadcast %cst_231 : f32 to vector<8x1xf32>
    %329 = arith.mulf %327, %328 : vector<8x1xf32>
    %c0_232 = arith.constant 0 : index
    %c0_233 = arith.constant 0 : index
    %330 = vector.load %arg18[%c0_232, %c0_233] : memref<8x2xf32, #tpu.memory_space<vmem>>, vector<8x2xf32>
    %331 = vector.broadcast %329 : vector<8x1xf32> to vector<8x2xf32>
    %332 = arith.mulf %330, %331 : vector<8x2xf32>
    %cst_234 = arith.constant dense<0.000000e+00> : vector<2xf32>
    %333 = vector.multi_reduction <add>, %332, %cst_234 [0] : vector<8x2xf32> to vector<2xf32>
    %334 = vector.shape_cast %333 : vector<2xf32> to vector<1x2xf32>
    %c0_235 = arith.constant 0 : index
    %c0_236 = arith.constant 0 : index
    %335 = vector.load %arg19[%c0_235, %c0_236] : memref<1x2xf32, #tpu.memory_space<vmem>>, vector<1x2xf32>
    %336 = arith.addf %334, %335 : vector<1x2xf32>
    %cst_237 = arith.constant 0.000000e+00 : f32
    %337 = vector.broadcast %cst_237 : f32 to vector<1x2xf32>
    %338 = arith.maximumf %336, %337 : vector<1x2xf32>
    %c0_238 = arith.constant 0 : index
    %c0_239 = arith.constant 0 : index
    %339 = vector.load %arg20[%c0_238, %c0_239] : memref<8x2xf32, #tpu.memory_space<vmem>>, vector<8x2xf32>
    %340 = vector.broadcast %338 : vector<1x2xf32> to vector<8x2xf32>
    %341 = arith.mulf %339, %340 : vector<8x2xf32>
    %cst_240 = arith.constant dense<0.000000e+00> : vector<8xf32>
    %342 = vector.multi_reduction <add>, %341, %cst_240 [1] : vector<8x2xf32> to vector<8xf32>
    %343 = vector.shape_cast %342 : vector<8xf32> to vector<8x1xf32>
    %c0_241 = arith.constant 0 : index
    %c0_242 = arith.constant 0 : index
    %344 = vector.load %arg21[%c0_241, %c0_242] : memref<8x1xf32, #tpu.memory_space<vmem>>, vector<8x1xf32>
    %345 = arith.addf %343, %344 : vector<8x1xf32>
    %cst_243 = arith.constant 0.000000e+00 : f32
    %346 = vector.broadcast %cst_243 : f32 to vector<8x1xf32>
    %347 = arith.subf %346, %345 : vector<8x1xf32>
    %348 = math.exp %347 : vector<8x1xf32>
    %cst_244 = arith.constant 1.000000e+00 : f32
    %349 = vector.broadcast %cst_244 : f32 to vector<8x1xf32>
    %350 = arith.addf %349, %348 : vector<8x1xf32>
    %cst_245 = arith.constant 1.000000e+00 : f32
    %351 = vector.broadcast %cst_245 : f32 to vector<8x1xf32>
    %352 = arith.divf %351, %350 : vector<8x1xf32>
    %353 = vector.broadcast %352 : vector<8x1xf32> to vector<8x256xf32>
    %354 = arith.mulf %197, %353 : vector<8x256xf32>
    %355 = arith.addf %3, %354 : vector<8x256xf32>
    %c0_246 = arith.constant 0 : index
    %c0_247 = arith.constant 0 : index
    %c0_248 = arith.constant 0 : index
    %356 = vector.load %arg22[%c0_246, %c0_247, %c0_248] : memref<1x8x256xf32, #tpu.memory_space<vmem>>, vector<1x8x256xf32>
    %357 = vector.shape_cast %356 : vector<1x8x256xf32> to vector<8x256xf32>
    %358 = vector.shape_cast %325 : vector<8x256xf32> to vector<1x8x256xf32>
    tpu.vector_store %arg22[%c0_246, %c0_247, %c0_248], %358 {strides = array<i32>} : memref<1x8x256xf32, #tpu.memory_space<vmem>>, vector<1x8x256xf32>,
    %c0_249 = arith.constant 0 : index
    %c0_250 = arith.constant 0 : index
    %c0_251 = arith.constant 0 : index
    %359 = vector.load %arg23[%c0_249, %c0_250, %c0_251] : memref<1x8x256xf32, #tpu.memory_space<vmem>>, vector<1x8x256xf32>
    %360 = vector.shape_cast %359 : vector<1x8x256xf32> to vector<8x256xf32>
    %361 = vector.shape_cast %355 : vector<8x256xf32> to vector<1x8x256xf32>
    tpu.vector_store %arg23[%c0_249, %c0_250, %c0_251], %361 {strides = array<i32>} : memref<1x8x256xf32, #tpu.memory_space<vmem>>, vector<1x8x256xf32>,
    return
  }
  func.func @transform_0(%arg0: i32) -> (i32, i32, i32) {
    %c0_i32 = arith.constant 0 : i32
    %c0_i32_0 = arith.constant 0 : i32
    %c0_i32_1 = arith.constant 0 : i32
    return %arg0, %c0_i32, %c0_i32_0 : i32, i32, i32
  }
  func.func @transform_1(%arg0: i32) -> (i32, i32, i32) {
    %c0_i32 = arith.constant 0 : i32
    %c0_i32_0 = arith.constant 0 : i32
    %c0_i32_1 = arith.constant 0 : i32
    return %arg0, %c0_i32, %c0_i32_0 : i32, i32, i32
  }
  func.func @transform_2(%arg0: i32) -> (i32, i32, i32) {
    %c0_i32 = arith.constant 0 : i32
    %c0_i32_0 = arith.constant 0 : i32
    %c0_i32_1 = arith.constant 0 : i32
    %c0_i32_2 = arith.constant 0 : i32
    return %c0_i32, %c0_i32_0, %c0_i32_1 : i32, i32, i32
  }
  func.func @transform_3(%arg0: i32) -> (i32, i32) {
    %c0_i32 = arith.constant 0 : i32
    %c0_i32_0 = arith.constant 0 : i32
    %c0_i32_1 = arith.constant 0 : i32
    return %c0_i32, %c0_i32_0 : i32, i32
  }
  func.func @transform_4(%arg0: i32) -> (i32, i32) {
    %c0_i32 = arith.constant 0 : i32
    %c0_i32_0 = arith.constant 0 : i32
    %c0_i32_1 = arith.constant 0 : i32
    return %c0_i32, %c0_i32_0 : i32, i32
  }
  func.func @transform_5(%arg0: i32) -> (i32, i32) {
    %c0_i32 = arith.constant 0 : i32
    %c0_i32_0 = arith.constant 0 : i32
    %c0_i32_1 = arith.constant 0 : i32
    return %c0_i32, %c0_i32_0 : i32, i32
  }
  func.func @transform_6(%arg0: i32) -> (i32, i32) {
    %c0_i32 = arith.constant 0 : i32
    %c0_i32_0 = arith.constant 0 : i32
    %c0_i32_1 = arith.constant 0 : i32
    return %c0_i32, %c0_i32_0 : i32, i32
  }
  func.func @transform_7(%arg0: i32) -> (i32, i32) {
    %c0_i32 = arith.constant 0 : i32
    %c0_i32_0 = arith.constant 0 : i32
    %c0_i32_1 = arith.constant 0 : i32
    return %c0_i32, %c0_i32_0 : i32, i32
  }
  func.func @transform_8(%arg0: i32) -> (i32, i32) {
    %c0_i32 = arith.constant 0 : i32
    %c0_i32_0 = arith.constant 0 : i32
    %c0_i32_1 = arith.constant 0 : i32
    return %c0_i32, %c0_i32_0 : i32, i32
  }
  func.func @transform_9(%arg0: i32) -> (i32, i32) {
    %c0_i32 = arith.constant 0 : i32
    %c0_i32_0 = arith.constant 0 : i32
    %c0_i32_1 = arith.constant 0 : i32
    return %c0_i32, %c0_i32_0 : i32, i32
  }
  func.func @transform_10(%arg0: i32) -> (i32, i32) {
    %c0_i32 = arith.constant 0 : i32
    %c0_i32_0 = arith.constant 0 : i32
    %c0_i32_1 = arith.constant 0 : i32
    return %c0_i32, %c0_i32_0 : i32, i32
  }
  func.func @transform_11(%arg0: i32) -> (i32, i32) {
    %c0_i32 = arith.constant 0 : i32
    %c0_i32_0 = arith.constant 0 : i32
    %c0_i32_1 = arith.constant 0 : i32
    return %c0_i32, %c0_i32_0 : i32, i32
  }
  func.func @transform_12(%arg0: i32) -> (i32, i32) {
    %c0_i32 = arith.constant 0 : i32
    %c0_i32_0 = arith.constant 0 : i32
    %c0_i32_1 = arith.constant 0 : i32
    return %c0_i32, %c0_i32_0 : i32, i32
  }
  func.func @transform_13(%arg0: i32) -> (i32, i32) {
    %c0_i32 = arith.constant 0 : i32
    %c0_i32_0 = arith.constant 0 : i32
    %c0_i32_1 = arith.constant 0 : i32
    return %c0_i32, %c0_i32_0 : i32, i32
  }
  func.func @transform_14(%arg0: i32) -> (i32, i32) {
    %c0_i32 = arith.constant 0 : i32
    %c0_i32_0 = arith.constant 0 : i32
    %c0_i32_1 = arith.constant 0 : i32
    return %c0_i32, %c0_i32_0 : i32, i32
  }
  func.func @transform_15(%arg0: i32) -> (i32, i32) {
    %c0_i32 = arith.constant 0 : i32
    %c0_i32_0 = arith.constant 0 : i32
    %c0_i32_1 = arith.constant 0 : i32
    return %c0_i32, %c0_i32_0 : i32, i32
  }
  func.func @transform_16(%arg0: i32) -> (i32, i32) {
    %c0_i32 = arith.constant 0 : i32
    %c0_i32_0 = arith.constant 0 : i32
    %c0_i32_1 = arith.constant 0 : i32
    return %c0_i32, %c0_i32_0 : i32, i32
  }
  func.func @transform_17(%arg0: i32) -> (i32, i32) {
    %c0_i32 = arith.constant 0 : i32
    %c0_i32_0 = arith.constant 0 : i32
    %c0_i32_1 = arith.constant 0 : i32
    return %c0_i32, %c0_i32_0 : i32, i32
  }
  func.func @transform_18(%arg0: i32) -> (i32, i32) {
    %c0_i32 = arith.constant 0 : i32
    %c0_i32_0 = arith.constant 0 : i32
    %c0_i32_1 = arith.constant 0 : i32
    return %c0_i32, %c0_i32_0 : i32, i32
  }
  func.func @transform_19(%arg0: i32) -> (i32, i32) {
    %c0_i32 = arith.constant 0 : i32
    %c0_i32_0 = arith.constant 0 : i32
    %c0_i32_1 = arith.constant 0 : i32
    return %c0_i32, %c0_i32_0 : i32, i32
  }
  func.func @transform_20(%arg0: i32) -> (i32, i32) {
    %c0_i32 = arith.constant 0 : i32
    %c0_i32_0 = arith.constant 0 : i32
    %c0_i32_1 = arith.constant 0 : i32
    return %c0_i32, %c0_i32_0 : i32, i32
  }
  func.func @transform_21(%arg0: i32) -> (i32, i32, i32) {
    %c0_i32 = arith.constant 0 : i32
    %c0_i32_0 = arith.constant 0 : i32
    %c0_i32_1 = arith.constant 0 : i32
    return %arg0, %c0_i32, %c0_i32_0 : i32, i32, i32
  }
  func.func @transform_22(%arg0: i32) -> (i32, i32, i32) {
    %c0_i32 = arith.constant 0 : i32
    %c0_i32_0 = arith.constant 0 : i32
    %c0_i32_1 = arith.constant 0 : i32
    return %arg0, %c0_i32, %c0_i32_0 : i32, i32, i32
  }
}

</mosaic_0001>

<llo_original>
// kernel: dpcab_forward.1
$region0: #{dpcab_forward.1}
  #allocation0 [shape = 'u32[]', space=smem, size = 0x4, offset = 0x4, fixed_abs, tag = 'smem constant byte address 0x4 - core index']
  #allocation1 [shape = 'u32[72,128]{1,0:T(1,128)}', space=vmem, size = 0x9000, scoped, tag = 'internal scratch']
  %s0 = inlined_call_operand.vmem [shape: f32[2,8,256], index: 0, kind: input, shape index: {}]
  %s1 = inlined_call_operand.vmem [shape: f32[2,8,256], index: 1, kind: input, shape index: {}]
  %s2 = inlined_call_operand.vmem [shape: f32[9,1,256], index: 2, kind: input, shape index: {}]
  %s3 = inlined_call_operand.vmem [shape: f32[8,72], index: 3, kind: input, shape index: {}]
  %s4 = inlined_call_operand.vmem [shape: f32[8,1], index: 4, kind: input, shape index: {}]
  %s5 = inlined_call_operand.vmem [shape: f32[8,72], index: 5, kind: input, shape index: {}]
  %s6 = inlined_call_operand.vmem [shape: f32[8,1], index: 6, kind: input, shape index: {}]
  %s7 = inlined_call_operand.vmem [shape: f32[8,72], index: 7, kind: input, shape index: {}]
  %s8 = inlined_call_operand.vmem [shape: f32[8,1], index: 8, kind: input, shape index: {}]
  %s9 = inlined_call_operand.vmem [shape: f32[8,72], index: 9, kind: input, shape index: {}]
  %s10 = inlined_call_operand.vmem [shape: f32[8,1], index: 10, kind: input, shape index: {}]
  %s11 = inlined_call_operand.vmem [shape: f32[8,144], index: 11, kind: input, shape index: {}]
  %s12 = inlined_call_operand.vmem [shape: f32[8,1], index: 12, kind: input, shape index: {}]
  %s13 = inlined_call_operand.vmem [shape: f32[8,2], index: 13, kind: input, shape index: {}]
  %s14 = inlined_call_operand.vmem [shape: f32[1,2], index: 14, kind: input, shape index: {}]
  %s15 = inlined_call_operand.vmem [shape: f32[8,2], index: 15, kind: input, shape index: {}]
  %s16 = inlined_call_operand.vmem [shape: f32[8,1], index: 16, kind: input, shape index: {}]
  %s17 = inlined_call_operand.vmem [shape: f32[8,2], index: 17, kind: input, shape index: {}]
  %s18 = inlined_call_operand.vmem [shape: f32[1,2], index: 18, kind: input, shape index: {}]
  %s19 = inlined_call_operand.vmem [shape: f32[8,2], index: 19, kind: input, shape index: {}]
  %s20 = inlined_call_operand.vmem [shape: f32[8,1], index: 20, kind: input, shape index: {}]
  %s21 = inlined_call_operand.vmem [shape: f32[2,8,256], index: 21, kind: output, shape index: {0}]
  %s22 = inlined_call_operand.vmem [shape: f32[2,8,256], index: 22, kind: output, shape index: {1}]
  %23 = xla_tuple %s21, %s22
  %s24 = sld [smem:[#allocation0]]
  $region125: #{dpcab_forward.1} parent=0
    _
  %s26 = ssub.s32 1, %s24
  %s27 = scalar_select 0, %s26, %s24
  loop: start=0, step=1, limit=4
  $region2: #{dpcab_forward.1} parent=0 // loop_pre_header
    _
  $region3: #{dpcab_forward.1} parent=0 // loop_header
    %s29 = sphi 0, %s33
    %p30 = scmp.ge.s32.totalorder %s29, 4
    %s39 = sphi 0, %s41
    %s42 = sphi 0, %s39
    %s43 = sphi 0, %s42
    %s59 = sphi 0, %s43
    %s65 = sphi 0, %s67
    %s68 = sphi 0, %s65
    %s69 = sphi 0, %s68
    %s85 = sphi 0, %s69
    %s89 = sphi 0, %s89
    %s91 = sphi 0, %s89
    %s92 = sphi 0, %s91
    %s106 = sphi 0, %s92
    %s110 = sphi 0, %s110
    %s112 = sphi 0, %s110
    %s113 = sphi 0, %s112
    %s127 = sphi 0, %s113
    %s131 = sphi 0, %s131
    %s133 = sphi 0, %s131
    %s134 = sphi 0, %s133
    %s148 = sphi 0, %s134
    %s152 = sphi 0, %s152
    %s154 = sphi 0, %s152
    %s155 = sphi 0, %s154
    %s169 = sphi 0, %s155
    %s173 = sphi 0, %s173
    %s175 = sphi 0, %s173
    %s176 = sphi 0, %s175
    %s190 = sphi 0, %s176
    %s194 = sphi 0, %s194
    %s196 = sphi 0, %s194
    %s197 = sphi 0, %s196
    %s211 = sphi 0, %s197
    %s215 = sphi 0, %s215
    %s217 = sphi 0, %s215
    %s218 = sphi 0, %s217
    %s232 = sphi 0, %s218
    %s236 = sphi 0, %s236
    %s238 = sphi 0, %s236
    %s239 = sphi 0, %s238
    %s253 = sphi 0, %s239
    %s257 = sphi 0, %s257
    %s259 = sphi 0, %s257
    %s260 = sphi 0, %s259
    %s274 = sphi 0, %s260
    %s278 = sphi 0, %s278
    %s280 = sphi 0, %s278
    %s281 = sphi 0, %s280
    %s295 = sphi 0, %s281
    %s299 = sphi 0, %s299
    %s301 = sphi 0, %s299
    %s302 = sphi 0, %s301
    %s316 = sphi 0, %s302
    %s320 = sphi 0, %s320
    %s322 = sphi 0, %s320
    %s323 = sphi 0, %s322
    %s337 = sphi 0, %s323
    %s341 = sphi 0, %s341
    %s343 = sphi 0, %s341
    %s344 = sphi 0, %s343
    %s358 = sphi 0, %s344
    %s362 = sphi 0, %s362
    %s364 = sphi 0, %s362
    %s365 = sphi 0, %s364
    %s379 = sphi 0, %s365
    %s383 = sphi 0, %s383
    %s385 = sphi 0, %s383
    %s386 = sphi 0, %s385
    %s400 = sphi 0, %s386
    %s404 = sphi 0, %s404
    %s406 = sphi 0, %s404
    %s407 = sphi 0, %s406
    %s421 = sphi 0, %s407
    %s425 = sphi 0, %s425
    %s427 = sphi 0, %s425
    %s428 = sphi 0, %s427
    %s442 = sphi 0, %s428
    %s446 = sphi 0, %s446
    %s448 = sphi 0, %s446
    %s449 = sphi 0, %s448
    %s463 = sphi 0, %s449
    %s467 = sphi 0, %s467
    %s469 = sphi 0, %s467
    %s470 = sphi 0, %s469
    %s484 = sphi 0, %s470
    %s490 = sphi 0, %s492
    %s493 = sphi 0, %s490
    %s494 = sphi 0, %s493
    %s510 = sphi 0, %s494
    %s516 = sphi 0, %s518
    %s519 = sphi 0, %s516
    %s520 = sphi 0, %s519
    %s536 = sphi 0, %s520
  $region4: #{dpcab_forward.1} parent=0 // loop_header_branch
    %32 = sbr.rel (%p30) target = $region8
  $region5: #{dpcab_forward.1} parent=0 // loop_body
    %s34 = ssub.s32 %s29, 1
    %s35 = ssub.s32 %s29, 2
    %s36 = sadd.s32 %s29, 1
    %s37 = ssub.s32 %s29, %s36
    %p38 = scmp.eq.s32.totalorder %s37, 0
    %s40 = sadd.s32 %s39, 1
    %s41 = scalar_select %p38, %s39, %s40
    %p44 = pneg %p38
    %p45 = scmp.eq.s32.totalorder %s29, 1
    %p46 = por %p44, %p45
    %p47 = scmp.ne.s32.totalorder %s39, %s42
    %p48 = scmp.eq.s32.totalorder %s29, 0
    %p49 = por %p47, %p48
    %p50 = scmp.ne.s32.totalorder %s39, %s42
    %p51 = scmp.eq.s32.totalorder %s34, 1
    %p52 = por %p50, %p51
    %p53 = scmp.ne.s32.totalorder %s42, %s43
    %p54 = scmp.eq.s32.totalorder %s34, 0
    %p55 = por %p53, %p54
    %p56 = scmp.ne.s32.totalorder %s42, %s43
    %p57 = scmp.eq.s32.totalorder %s35, 1
    %p58 = por %p56, %p57
    %p60 = scmp.ne.s32.totalorder %s43, %s59
    %p61 = scmp.eq.s32.totalorder %s35, 0
    %p62 = por %p60, %p61
    %s63 = ssub.s32 %s29, %s36
    %p64 = scmp.eq.s32.totalorder %s63, 0
    %s66 = sadd.s32 %s65, 1
    %s67 = scalar_select %p64, %s65, %s66
    %p70 = pneg %p64
    %p71 = scmp.eq.s32.totalorder %s29, 1
    %p72 = por %p70, %p71
    %p73 = scmp.ne.s32.totalorder %s65, %s68
    %p74 = scmp.eq.s32.totalorder %s29, 0
    %p75 = por %p73, %p74
    %p76 = scmp.ne.s32.totalorder %s65, %s68
    %p77 = scmp.eq.s32.totalorder %s34, 1
    %p78 = por %p76, %p77
    %p79 = scmp.ne.s32.totalorder %s68, %s69
    %p80 = scmp.eq.s32.totalorder %s34, 0
    %p81 = por %p79, %p80
    %p82 = scmp.ne.s32.totalorder %s68, %s69
    %p83 = scmp.eq.s32.totalorder %s35, 1
    %p84 = por %p82, %p83
    %p86 = scmp.ne.s32.totalorder %s69, %s85
    %p87 = scmp.eq.s32.totalorder %s35, 0
    %p88 = por %p86, %p87
    %s90 = sadd.s32 %s89, 1
    %p93 = scmp.eq.s32.totalorder %s29, 1
    %p94 = scmp.ne.s32.totalorder %s89, %s91
    %p95 = scmp.eq.s32.totalorder %s29, 0
    %p96 = por %p94, %p95
    %p97 = scmp.ne.s32.totalorder %s89, %s91
    %p98 = scmp.eq.s32.totalorder %s34, 1
    %p99 = por %p97, %p98
    %p100 = scmp.ne.s32.totalorder %s91, %s92
    %p101 = scmp.eq.s32.totalorder %s34, 0
    %p102 = por %p100, %p101
    %p103 = scmp.ne.s32.totalorder %s91, %s92
    %p104 = scmp.eq.s32.totalorder %s35, 1
    %p105 = por %p103, %p104
    %p107 = scmp.ne.s32.totalorder %s92, %s106
    %p108 = scmp.eq.s32.totalorder %s35, 0
    %p109 = por %p107, %p108
    %s111 = sadd.s32 %s110, 1
    %p114 = scmp.eq.s32.totalorder %s29, 1
    %p115 = scmp.ne.s32.totalorder %s110, %s112
    %p116 = scmp.eq.s32.totalorder %s29, 0
    %p117 = por %p115, %p116
    %p118 = scmp.ne.s32.totalorder %s110, %s112
    %p119 = scmp.eq.s32.totalorder %s34, 1
    %p120 = por %p118, %p119
    %p121 = scmp.ne.s32.totalorder %s112, %s113
    %p122 = scmp.eq.s32.totalorder %s34, 0
    %p123 = por %p121, %p122
    %p124 = scmp.ne.s32.totalorder %s112, %s113
    %p125 = scmp.eq.s32.totalorder %s35, 1
    %p126 = por %p124, %p125
    %p128 = scmp.ne.s32.totalorder %s113, %s127
    %p129 = scmp.eq.s32.totalorder %s35, 0
    %p130 = por %p128, %p129
    %s132 = sadd.s32 %s131, 1
    %p135 = scmp.eq.s32.totalorder %s29, 1
    %p136 = scmp.ne.s32.totalorder %s131, %s133
    %p137 = scmp.eq.s32.totalorder %s29, 0
    %p138 = por %p136, %p137
    %p139 = scmp.ne.s32.totalorder %s131, %s133
    %p140 = scmp.eq.s32.totalorder %s34, 1
    %p141 = por %p139, %p140
    %p142 = scmp.ne.s32.totalorder %s133, %s134
    %p143 = scmp.eq.s32.totalorder %s34, 0
    %p144 = por %p142, %p143
    %p145 = scmp.ne.s32.totalorder %s133, %s134
    %p146 = scmp.eq.s32.totalorder %s35, 1
    %p147 = por %p145, %p146
    %p149 = scmp.ne.s32.totalorder %s134, %s148
    %p150 = scmp.eq.s32.totalorder %s35, 0
    %p151 = por %p149, %p150
    %s153 = sadd.s32 %s152, 1
    %p156 = scmp.eq.s32.totalorder %s29, 1
    %p157 = scmp.ne.s32.totalorder %s152, %s154
    %p158 = scmp.eq.s32.totalorder %s29, 0
    %p159 = por %p157, %p158
    %p160 = scmp.ne.s32.totalorder %s152, %s154
    %p161 = scmp.eq.s32.totalorder %s34, 1
    %p162 = por %p160, %p161
    %p163 = scmp.ne.s32.totalorder %s154, %s155
    %p164 = scmp.eq.s32.totalorder %s34, 0
    %p165 = por %p163, %p164
    %p166 = scmp.ne.s32.totalorder %s154, %s155
    %p167 = scmp.eq.s32.totalorder %s35, 1
    %p168 = por %p166, %p167
    %p170 = scmp.ne.s32.totalorder %s155, %s169
    %p171 = scmp.eq.s32.totalorder %s35, 0
    %p172 = por %p170, %p171
    %s174 = sadd.s32 %s173, 1
    %p177 = scmp.eq.s32.totalorder %s29, 1
    %p178 = scmp.ne.s32.totalorder %s173, %s175
    %p179 = scmp.eq.s32.totalorder %s29, 0
    %p180 = por %p178, %p179
    %p181 = scmp.ne.s32.totalorder %s173, %s175
    %p182 = scmp.eq.s32.totalorder %s34, 1
    %p183 = por %p181, %p182
    %p184 = scmp.ne.s32.totalorder %s175, %s176
    %p185 = scmp.eq.s32.totalorder %s34, 0
    %p186 = por %p184, %p185
    %p187 = scmp.ne.s32.totalorder %s175, %s176
    %p188 = scmp.eq.s32.totalorder %s35, 1
    %p189 = por %p187, %p188
    %p191 = scmp.ne.s32.totalorder %s176, %s190
    %p192 = scmp.eq.s32.totalorder %s35, 0
    %p193 = por %p191, %p192
    %s195 = sadd.s32 %s194, 1
    %p198 = scmp.eq.s32.totalorder %s29, 1
    %p199 = scmp.ne.s32.totalorder %s194, %s196
    %p200 = scmp.eq.s32.totalorder %s29, 0
    %p201 = por %p199, %p200
    %p202 = scmp.ne.s32.totalorder %s194, %s196
    %p203 = scmp.eq.s32.totalorder %s34, 1
    %p204 = por %p202, %p203
    %p205 = scmp.ne.s32.totalorder %s196, %s197
    %p206 = scmp.eq.s32.totalorder %s34, 0
    %p207 = por %p205, %p206
    %p208 = scmp.ne.s32.totalorder %s196, %s197
    %p209 = scmp.eq.s32.totalorder %s35, 1
    %p210 = por %p208, %p209
    %p212 = scmp.ne.s32.totalorder %s197, %s211
    %p213 = scmp.eq.s32.totalorder %s35, 0
    %p214 = por %p212, %p213
    %s216 = sadd.s32 %s215, 1
    %p219 = scmp.eq.s32.totalorder %s29, 1
    %p220 = scmp.ne.s32.totalorder %s215, %s217
    %p221 = scmp.eq.s32.totalorder %s29, 0
    %p222 = por %p220, %p221
    %p223 = scmp.ne.s32.totalorder %s215, %s217
    %p224 = scmp.eq.s32.totalorder %s34, 1
    %p225 = por %p223, %p224
    %p226 = scmp.ne.s32.totalorder %s217, %s218
    %p227 = scmp.eq.s32.totalorder %s34, 0
    %p228 = por %p226, %p227
    %p229 = scmp.ne.s32.totalorder %s217, %s218
    %p230 = scmp.eq.s32.totalorder %s35, 1
    %p231 = por %p229, %p230
    %p233 = scmp.ne.s32.totalorder %s218, %s232
    %p234 = scmp.eq.s32.totalorder %s35, 0
    %p235 = por %p233, %p234
    %s237 = sadd.s32 %s236, 1
    %p240 = scmp.eq.s32.totalorder %s29, 1
    %p241 = scmp.ne.s32.totalorder %s236, %s238
    %p242 = scmp.eq.s32.totalorder %s29, 0
    %p243 = por %p241, %p242
    %p244 = scmp.ne.s32.totalorder %s236, %s238
    %p245 = scmp.eq.s32.totalorder %s34, 1
    %p246 = por %p244, %p245
    %p247 = scmp.ne.s32.totalorder %s238, %s239
    %p248 = scmp.eq.s32.totalorder %s34, 0
    %p249 = por %p247, %p248
    %p250 = scmp.ne.s32.totalorder %s238, %s239
    %p251 = scmp.eq.s32.totalorder %s35, 1
    %p252 = por %p250, %p251
    %p254 = scmp.ne.s32.totalorder %s239, %s253
    %p255 = scmp.eq.s32.totalorder %s35, 0
    %p256 = por %p254, %p255
    %s258 = sadd.s32 %s257, 1
    %p261 = scmp.eq.s32.totalorder %s29, 1
    %p262 = scmp.ne.s32.totalorder %s257, %s259
    %p263 = scmp.eq.s32.totalorder %s29, 0
    %p264 = por %p262, %p263
    %p265 = scmp.ne.s32.totalorder %s257, %s259
    %p266 = scmp.eq.s32.totalorder %s34, 1
    %p267 = por %p265, %p266
    %p268 = scmp.ne.s32.totalorder %s259, %s260
    %p269 = scmp.eq.s32.totalorder %s34, 0
    %p270 = por %p268, %p269
    %p271 = scmp.ne.s32.totalorder %s259, %s260
    %p272 = scmp.eq.s32.totalorder %s35, 1
    %p273 = por %p271, %p272
    %p275 = scmp.ne.s32.totalorder %s260, %s274
    %p276 = scmp.eq.s32.totalorder %s35, 0
    %p277 = por %p275, %p276
    %s279 = sadd.s32 %s278, 1
    %p282 = scmp.eq.s32.totalorder %s29, 1
    %p283 = scmp.ne.s32.totalorder %s278, %s280
    %p284 = scmp.eq.s32.totalorder %s29, 0
    %p285 = por %p283, %p284
    %p286 = scmp.ne.s32.totalorder %s278, %s280
    %p287 = scmp.eq.s32.totalorder %s34, 1
    %p288 = por %p286, %p287
    %p289 = scmp.ne.s32.totalorder %s280, %s281
    %p290 = scmp.eq.s32.totalorder %s34, 0
    %p291 = por %p289, %p290
    %p292 = scmp.ne.s32.totalorder %s280, %s281
    %p293 = scmp.eq.s32.totalorder %s35, 1
    %p294 = por %p292, %p293
    %p296 = scmp.ne.s32.totalorder %s281, %s295
    %p297 = scmp.eq.s32.totalorder %s35, 0
    %p298 = por %p296, %p297
    %s300 = sadd.s32 %s299, 1
    %p303 = scmp.eq.s32.totalorder %s29, 1
    %p304 = scmp.ne.s32.totalorder %s299, %s301
    %p305 = scmp.eq.s32.totalorder %s29, 0
    %p306 = por %p304, %p305
    %p307 = scmp.ne.s32.totalorder %s299, %s301
    %p308 = scmp.eq.s32.totalorder %s34, 1
    %p309 = por %p307, %p308
    %p310 = scmp.ne.s32.totalorder %s301, %s302
    %p311 = scmp.eq.s32.totalorder %s34, 0
    %p312 = por %p310, %p311
    %p313 = scmp.ne.s32.totalorder %s301, %s302
    %p314 = scmp.eq.s32.totalorder %s35, 1
    %p315 = por %p313, %p314
    %p317 = scmp.ne.s32.totalorder %s302, %s316
    %p318 = scmp.eq.s32.totalorder %s35, 0
    %p319 = por %p317, %p318
    %s321 = sadd.s32 %s320, 1
    %p324 = scmp.eq.s32.totalorder %s29, 1
    %p325 = scmp.ne.s32.totalorder %s320, %s322
    %p326 = scmp.eq.s32.totalorder %s29, 0
    %p327 = por %p325, %p326
    %p328 = scmp.ne.s32.totalorder %s320, %s322
    %p329 = scmp.eq.s32.totalorder %s34, 1
    %p330 = por %p328, %p329
    %p331 = scmp.ne.s32.totalorder %s322, %s323
    %p332 = scmp.eq.s32.totalorder %s34, 0
    %p333 = por %p331, %p332
    %p334 = scmp.ne.s32.totalorder %s322, %s323
    %p335 = scmp.eq.s32.totalorder %s35, 1
    %p336 = por %p334, %p335
    %p338 = scmp.ne.s32.totalorder %s323, %s337
    %p339 = scmp.eq.s32.totalorder %s35, 0
    %p340 = por %p338, %p339
    %s342 = sadd.s32 %s341, 1
    %p345 = scmp.eq.s32.totalorder %s29, 1
    %p346 = scmp.ne.s32.totalorder %s341, %s343
    %p347 = scmp.eq.s32.totalorder %s29, 0
    %p348 = por %p346, %p347
    %p349 = scmp.ne.s32.totalorder %s341, %s343
    %p350 = scmp.eq.s32.totalorder %s34, 1
    %p351 = por %p349, %p350
    %p352 = scmp.ne.s32.totalorder %s343, %s344
    %p353 = scmp.eq.s32.totalorder %s34, 0
    %p354 = por %p352, %p353
    %p355 = scmp.ne.s32.totalorder %s343, %s344
    %p356 = scmp.eq.s32.totalorder %s35, 1
    %p357 = por %p355, %p356
    %p359 = scmp.ne.s32.totalorder %s344, %s358
    %p360 = scmp.eq.s32.totalorder %s35, 0
    %p361 = por %p359, %p360
    %s363 = sadd.s32 %s362, 1
    %p366 = scmp.eq.s32.totalorder %s29, 1
    %p367 = scmp.ne.s32.totalorder %s362, %s364
    %p368 = scmp.eq.s32.totalorder %s29, 0
    %p369 = por %p367, %p368
    %p370 = scmp.ne.s32.totalorder %s362, %s364
    %p371 = scmp.eq.s32.totalorder %s34, 1
    %p372 = por %p370, %p371
    %p373 = scmp.ne.s32.totalorder %s364, %s365
    %p374 = scmp.eq.s32.totalorder %s34, 0
    %p375 = por %p373, %p374
    %p376 = scmp.ne.s32.totalorder %s364, %s365
    %p377 = scmp.eq.s32.totalorder %s35, 1
    %p378 = por %p376, %p377
    %p380 = scmp.ne.s32.totalorder %s365, %s379
    %p381 = scmp.eq.s32.totalorder %s35, 0
    %p382 = por %p380, %p381
    %s384 = sadd.s32 %s383, 1
    %p387 = scmp.eq.s32.totalorder %s29, 1
    %p388 = scmp.ne.s32.totalorder %s383, %s385
    %p389 = scmp.eq.s32.totalorder %s29, 0
    %p390 = por %p388, %p389
    %p391 = scmp.ne.s32.totalorder %s383, %s385
    %p392 = scmp.eq.s32.totalorder %s34, 1
    %p393 = por %p391, %p392
    %p394 = scmp.ne.s32.totalorder %s385, %s386
    %p395 = scmp.eq.s32.totalorder %s34, 0
    %p396 = por %p394, %p395
    %p397 = scmp.ne.s32.totalorder %s385, %s386
    %p398 = scmp.eq.s32.totalorder %s35, 1
    %p399 = por %p397, %p398
    %p401 = scmp.ne.s32.totalorder %s386, %s400
    %p402 = scmp.eq.s32.totalorder %s35, 0
    %p403 = por %p401, %p402
    %s405 = sadd.s32 %s404, 1
    %p408 = scmp.eq.s32.totalorder %s29, 1
    %p409 = scmp.ne.s32.totalorder %s404, %s406
    %p410 = scmp.eq.s32.totalorder %s29, 0
    %p411 = por %p409, %p410
    %p412 = scmp.ne.s32.totalorder %s404, %s406
    %p413 = scmp.eq.s32.totalorder %s34, 1
    %p414 = por %p412, %p413
    %p415 = scmp.ne.s32.totalorder %s406, %s407
    %p416 = scmp.eq.s32.totalorder %s34, 0
    %p417 = por %p415, %p416
    %p418 = scmp.ne.s32.totalorder %s406, %s407
    %p419 = scmp.eq.s32.totalorder %s35, 1
    %p420 = por %p418, %p419
    %p422 = scmp.ne.s32.totalorder %s407, %s421
    %p423 = scmp.eq.s32.totalorder %s35, 0
    %p424 = por %p422, %p423
    %s426 = sadd.s32 %s425, 1
    %p429 = scmp.eq.s32.totalorder %s29, 1
    %p430 = scmp.ne.s32.totalorder %s425, %s427
    %p431 = scmp.eq.s32.totalorder %s29, 0
    %p432 = por %p430, %p431
    %p433 = scmp.ne.s32.totalorder %s425, %s427
    %p434 = scmp.eq.s32.totalorder %s34, 1
    %p435 = por %p433, %p434
    %p436 = scmp.ne.s32.totalorder %s427, %s428
    %p437 = scmp.eq.s32.totalorder %s34, 0
    %p438 = por %p436, %p437
    %p439 = scmp.ne.s32.totalorder %s427, %s428
    %p440 = scmp.eq.s32.totalorder %s35, 1
    %p441 = por %p439, %p440
    %p443 = scmp.ne.s32.totalorder %s428, %s442
    %p444 = scmp.eq.s32.totalorder %s35, 0
    %p445 = por %p443, %p444
    %s447 = sadd.s32 %s446, 1
    %p450 = scmp.eq.s32.totalorder %s29, 1
    %p451 = scmp.ne.s32.totalorder %s446, %s448
    %p452 = scmp.eq.s32.totalorder %s29, 0
    %p453 = por %p451, %p452
    %p454 = scmp.ne.s32.totalorder %s446, %s448
    %p455 = scmp.eq.s32.totalorder %s34, 1
    %p456 = por %p454, %p455
    %p457 = scmp.ne.s32.totalorder %s448, %s449
    %p458 = scmp.eq.s32.totalorder %s34, 0
    %p459 = por %p457, %p458
    %p460 = scmp.ne.s32.totalorder %s448, %s449
    %p461 = scmp.eq.s32.totalorder %s35, 1
    %p462 = por %p460, %p461
    %p464 = scmp.ne.s32.totalorder %s449, %s463
    %p465 = scmp.eq.s32.totalorder %s35, 0
    %p466 = por %p464, %p465
    %s468 = sadd.s32 %s467, 1
    %p471 = scmp.eq.s32.totalorder %s29, 1
    %p472 = scmp.ne.s32.totalorder %s467, %s469
    %p473 = scmp.eq.s32.totalorder %s29, 0
    %p474 = por %p472, %p473
    %p475 = scmp.ne.s32.totalorder %s467, %s469
    %p476 = scmp.eq.s32.totalorder %s34, 1
    %p477 = por %p475, %p476
    %p478 = scmp.ne.s32.totalorder %s469, %s470
    %p479 = scmp.eq.s32.totalorder %s34, 0
    %p480 = por %p478, %p479
    %p481 = scmp.ne.s32.totalorder %s469, %s470
    %p482 = scmp.eq.s32.totalorder %s35, 1
    %p483 = por %p481, %p482
    %p485 = scmp.ne.s32.totalorder %s470, %s484
    %p486 = scmp.eq.s32.totalorder %s35, 0
    %p487 = por %p485, %p486
    %s488 = ssub.s32 %s29, %s36
    %p489 = scmp.eq.s32.totalorder %s488, 0
    %s491 = sadd.s32 %s490, 1
    %s492 = scalar_select %p489, %s490, %s491
    %p495 = pneg %p489
    %p496 = scmp.eq.s32.totalorder %s29, 1
    %p497 = por %p495, %p496
    %p498 = scmp.ne.s32.totalorder %s490, %s493
    %p499 = scmp.eq.s32.totalorder %s29, 0
    %p500 = por %p498, %p499
    %p501 = scmp.ne.s32.totalorder %s490, %s493
    %p502 = scmp.eq.s32.totalorder %s34, 1
    %p503 = por %p501, %p502
    %p504 = scmp.ne.s32.totalorder %s493, %s494
    %p505 = scmp.eq.s32.totalorder %s34, 0
    %p506 = por %p504, %p505
    %p507 = scmp.ne.s32.totalorder %s493, %s494
    %p508 = scmp.eq.s32.totalorder %s35, 1
    %p509 = por %p507, %p508
    %p511 = scmp.ne.s32.totalorder %s494, %s510
    %p512 = scmp.eq.s32.totalorder %s35, 0
    %p513 = por %p511, %p512
    %s514 = ssub.s32 %s29, %s36
    %p515 = scmp.eq.s32.totalorder %s514, 0
    %s517 = sadd.s32 %s516, 1
    %s518 = scalar_select %p515, %s516, %s517
    %p521 = pneg %p515
    %p522 = scmp.eq.s32.totalorder %s29, 1
    %p523 = por %p521, %p522
    %p524 = scmp.ne.s32.totalorder %s516, %s519
    %p525 = scmp.eq.s32.totalorder %s29, 0
    %p526 = por %p524, %p525
    %p527 = scmp.ne.s32.totalorder %s516, %s519
    %p528 = scmp.eq.s32.totalorder %s34, 1
    %p529 = por %p527, %p528
    %p530 = scmp.ne.s32.totalorder %s519, %s520
    %p531 = scmp.eq.s32.totalorder %s34, 0
    %p532 = por %p530, %p531
    %p533 = scmp.ne.s32.totalorder %s519, %s520
    %p534 = scmp.eq.s32.totalorder %s35, 1
    %p535 = por %p533, %p534
    %p537 = scmp.ne.s32.totalorder %s520, %s536
    %p538 = scmp.eq.s32.totalorder %s35, 0
    %p539 = por %p537, %p538
    %p540 = scmp.le.s32.totalorder 1, %s29
    %p541 = scmp.lt.s32.totalorder %s29, 3
    %p542 = pnand %p540, %p541
    %p543 = pneg %p542
    // Predicated region
    $region9: #{dpcab_forward.1} parent=5 // pred_check
      _
    $region10: #{dpcab_forward.1} parent=5 // pred_check_branch
      %545 = sbr.rel (%p542) target = $region12
    $region11: #{dpcab_forward.1} parent=5 // pred_region
      %s546 = ssub.s32 %s29, 1
      // Predicated region
      $region13: #{dpcab_forward.1} parent=11 // pred_check
        %p547 = pneg %p102
      $region14: #{dpcab_forward.1} parent=11 // pred_check_branch
        %549 = sbr.rel (%p547) target = $region16
      $region15: #{dpcab_forward.1} parent=11 // pred_region
        _
      $region16: #{dpcab_forward.1} parent=11 // pred_fallthru
        _
      // Predicated region
      $region17: #{dpcab_forward.1} parent=11 // pred_check
        %p550 = pneg %p123
      $region18: #{dpcab_forward.1} parent=11 // pred_check_branch
        %552 = sbr.rel (%p550) target = $region20
      $region19: #{dpcab_forward.1} parent=11 // pred_region
        _
      $region20: #{dpcab_forward.1} parent=11 // pred_fallthru
        _
      // Predicated region
      $region21: #{dpcab_forward.1} parent=11 // pred_check
        %p553 = pneg %p144
      $region22: #{dpcab_forward.1} parent=11 // pred_check_branch
        %555 = sbr.rel (%p553) target = $region24
      $region23: #{dpcab_forward.1} parent=11 // pred_region
        _
      $region24: #{dpcab_forward.1} parent=11 // pred_fallthru
        _
      // Predicated region
      $region25: #{dpcab_forward.1} parent=11 // pred_check
        %p556 = pneg %p165
      $region26: #{dpcab_forward.1} parent=11 // pred_check_branch
        %558 = sbr.rel (%p556) target = $region28
      $region27: #{dpcab_forward.1} parent=11 // pred_region
        _
      $region28: #{dpcab_forward.1} parent=11 // pred_fallthru
        _
      // Predicated region
      $region29: #{dpcab_forward.1} parent=11 // pred_check
        %p559 = pneg %p186
      $region30: #{dpcab_forward.1} parent=11 // pred_check_branch
        %561 = sbr.rel (%p559) target = $region32
      $region31: #{dpcab_forward.1} parent=11 // pred_region
        _
      $region32: #{dpcab_forward.1} parent=11 // pred_fallthru
        _
      // Predicated region
      $region33: #{dpcab_forward.1} parent=11 // pred_check
        %p562 = pneg %p207
      $region34: #{dpcab_forward.1} parent=11 // pred_check_branch
        %564 = sbr.rel (%p562) target = $region36
      $region35: #{dpcab_forward.1} parent=11 // pred_region
        _
      $region36: #{dpcab_forward.1} parent=11 // pred_fallthru
        _
      // Predicated region
      $region37: #{dpcab_forward.1} parent=11 // pred_check
        %p565 = pneg %p228
      $region38: #{dpcab_forward.1} parent=11 // pred_check_branch
        %567 = sbr.rel (%p565) target = $region40
      $region39: #{dpcab_forward.1} parent=11 // pred_region
        _
      $region40: #{dpcab_forward.1} parent=11 // pred_fallthru
        _
      // Predicated region
      $region41: #{dpcab_forward.1} parent=11 // pred_check
        %p568 = pneg %p249
      $region42: #{dpcab_forward.1} parent=11 // pred_check_branch
        %570 = sbr.rel (%p568) target = $region44
      $region43: #{dpcab_forward.1} parent=11 // pred_region
        _
      $region44: #{dpcab_forward.1} parent=11 // pred_fallthru
        _
      // Predicated region
      $region45: #{dpcab_forward.1} parent=11 // pred_check
        %p571 = pneg %p270
      $region46: #{dpcab_forward.1} parent=11 // pred_check_branch
        %573 = sbr.rel (%p571) target = $region48
      $region47: #{dpcab_forward.1} parent=11 // pred_region
        _
      $region48: #{dpcab_forward.1} parent=11 // pred_fallthru
        _
      // Predicated region
      $region49: #{dpcab_forward.1} parent=11 // pred_check
        %p574 = pneg %p291
      $region50: #{dpcab_forward.1} parent=11 // pred_check_branch
        %576 = sbr.rel (%p574) target = $region52
      $region51: #{dpcab_forward.1} parent=11 // pred_region
        _
      $region52: #{dpcab_forward.1} parent=11 // pred_fallthru
        _
      // Predicated region
      $region53: #{dpcab_forward.1} parent=11 // pred_check
        %p577 = pneg %p312
      $region54: #{dpcab_forward.1} parent=11 // pred_check_branch
        %579 = sbr.rel (%p577) target = $region56
      $region55: #{dpcab_forward.1} parent=11 // pred_region
        _
      $region56: #{dpcab_forward.1} parent=11 // pred_fallthru
        _
      // Predicated region
      $region57: #{dpcab_forward.1} parent=11 // pred_check
        %p580 = pneg %p333
      $region58: #{dpcab_forward.1} parent=11 // pred_check_branch
        %582 = sbr.rel (%p580) target = $region60
      $region59: #{dpcab_forward.1} parent=11 // pred_region
        _
      $region60: #{dpcab_forward.1} parent=11 // pred_fallthru
        _
      // Predicated region
      $region61: #{dpcab_forward.1} parent=11 // pred_check
        %p583 = pneg %p354
      $region62: #{dpcab_forward.1} parent=11 // pred_check_branch
        %585 = sbr.rel (%p583) target = $region64
      $region63: #{dpcab_forward.1} parent=11 // pred_region
        _
      $region64: #{dpcab_forward.1} parent=11 // pred_fallthru
        _
      // Predicated region
      $region65: #{dpcab_forward.1} parent=11 // pred_check
        %p586 = pneg %p375
      $region66: #{dpcab_forward.1} parent=11 // pred_check_branch
        %588 = sbr.rel (%p586) target = $region68
      $region67: #{dpcab_forward.1} parent=11 // pred_region
        _
      $region68: #{dpcab_forward.1} parent=11 // pred_fallthru
        _
      // Predicated region
      $region69: #{dpcab_forward.1} parent=11 // pred_check
        %p589 = pneg %p396
      $region70: #{dpcab_forward.1} parent=11 // pred_check_branch
        %591 = sbr.rel (%p589) target = $region72
      $region71: #{dpcab_forward.1} parent=11 // pred_region
        _
      $region72: #{dpcab_forward.1} parent=11 // pred_fallthru
        _
      // Predicated region
      $region73: #{dpcab_forward.1} parent=11 // pred_check
        %p592 = pneg %p417
      $region74: #{dpcab_forward.1} parent=11 // pred_check_branch
        %594 = sbr.rel (%p592) target = $region76
      $region75: #{dpcab_forward.1} parent=11 // pred_region
        _
      $region76: #{dpcab_forward.1} parent=11 // pred_fallthru
        _
      // Predicated region
      $region77: #{dpcab_forward.1} parent=11 // pred_check
        %p595 = pneg %p438
      $region78: #{dpcab_forward.1} parent=11 // pred_check_branch
        %597 = sbr.rel (%p595) target = $region80
      $region79: #{dpcab_forward.1} parent=11 // pred_region
        _
      $region80: #{dpcab_forward.1} parent=11 // pred_fallthru
        _
      // Predicated region
      $region81: #{dpcab_forward.1} parent=11 // pred_check
        %p598 = pneg %p459
      $region82: #{dpcab_forward.1} parent=11 // pred_check_branch
        %600 = sbr.rel (%p598) target = $region84
      $region83: #{dpcab_forward.1} parent=11 // pred_region
        _
      $region84: #{dpcab_forward.1} parent=11 // pred_fallthru
        _
      // Predicated region
      $region85: #{dpcab_forward.1} parent=11 // pred_check
        %p601 = pneg %p480
      $region86: #{dpcab_forward.1} parent=11 // pred_check_branch
        %603 = sbr.rel (%p601) target = $region88
      $region87: #{dpcab_forward.1} parent=11 // pred_region
        _
      $region88: #{dpcab_forward.1} parent=11 // pred_fallthru
        _
    $region12: #{dpcab_forward.1} parent=5 // pred_fallthru
      _
    %p604 = scmp.lt.s32.totalorder %s29, 2
    // Predicated region
    $region89: #{dpcab_forward.1} parent=5 // pred_check
      %p605 = pneg %p604
    $region90: #{dpcab_forward.1} parent=5 // pred_check_branch
      %607 = sbr.rel (%p605) target = $region92
    $region91: #{dpcab_forward.1} parent=5 // pred_region
      // Predicated region
      $region93: #{dpcab_forward.1} parent=91 // pred_check
        %p608 = pneg %p49
      $region94: #{dpcab_forward.1} parent=91 // pred_check_branch
        %610 = sbr.rel (%p608) target = $region96
      $region95: #{dpcab_forward.1} parent=91 // pred_region
        %p611 = scmp.lt.s32.totalorder %s29, 1
        %s612 = scalar_select %p611, %s29, 1
        %s613 = smul.addr %s612, 2
        %s614 = smul.addr %s613, 8
        %s615 = scalar_lea.vmem %s0, %s614
      $region96: #{dpcab_forward.1} parent=91 // pred_fallthru
        _
      // Predicated region
      $region97: #{dpcab_forward.1} parent=91 // pred_check
        %p616 = pneg %p75
      $region98: #{dpcab_forward.1} parent=91 // pred_check_branch
        %618 = sbr.rel (%p616) target = $region100
      $region99: #{dpcab_forward.1} parent=91 // pred_region
        %p619 = scmp.lt.s32.totalorder %s29, 1
        %s620 = scalar_select %p619, %s29, 1
        %s621 = smul.addr %s620, 2
        %s622 = smul.addr %s621, 8
        %s623 = scalar_lea.vmem %s1, %s622
      $region100: #{dpcab_forward.1} parent=91 // pred_fallthru
        _
    $region92: #{dpcab_forward.1} parent=5 // pred_fallthru
      _
    %p624 = scmp.le.s32.totalorder 1, %s29
    %p625 = scmp.lt.s32.totalorder %s29, 3
    %p626 = pnand %p624, %p625
    %p627 = pneg %p626
    // Predicated region
    $region101: #{dpcab_forward.1} parent=5 // pred_check
      _
    $region102: #{dpcab_forward.1} parent=5 // pred_check_branch
      %629 = sbr.rel (%p626) target = $region104
    $region103: #{dpcab_forward.1} parent=5 // pred_region
      %s630 = ssub.s32 %s29, 1
      %p631 = scmp.lt.s32.totalorder %s34, 1
      %s632 = scalar_select %p631, %s34, 1
      %s633 = smul.addr %s632, 2
      %s634 = smul.addr %s633, 8
      %s635 = scalar_lea.vmem %s0, %s634
      %p636 = pneg %p55
      %p637 = pneg %p52
      %p638 = scmp.lt.s32.totalorder %s34, 1
      %s639 = scalar_select %p638, %s34, 1
      %s640 = smul.addr %s639, 2
      %s641 = smul.addr %s640, 8
      %s642 = scalar_lea.vmem %s1, %s641
      %p643 = pneg %p81
      %p644 = pneg %p78
      %p645 = pneg %p102
      %p646 = pneg %p99
      %p647 = pneg %p123
      %p648 = pneg %p120
      %p649 = pneg %p144
      %p650 = pneg %p141
      %p651 = pneg %p165
      %p652 = pneg %p162
      %p653 = pneg %p186
      %p654 = pneg %p183
      %p655 = pneg %p207
      %p656 = pneg %p204
      %p657 = pneg %p228
      %p658 = pneg %p225
      %p659 = pneg %p249
      %p660 = pneg %p246
      %p661 = pneg %p270
      %p662 = pneg %p267
      %p663 = pneg %p291
      %p664 = pneg %p288
      %p665 = pneg %p312
      %p666 = pneg %p309
      %p667 = pneg %p333
      %p668 = pneg %p330
      %p669 = pneg %p354
      %p670 = pneg %p351
      %p671 = pneg %p375
      %p672 = pneg %p372
      %p673 = pneg %p396
      %p674 = pneg %p393
      %p675 = pneg %p417
      %p676 = pneg %p414
      %p677 = pneg %p438
      %p678 = pneg %p435
      %p679 = pneg %p459
      %p680 = pneg %p456
      %p681 = pneg %p480
      %p682 = pneg %p477
      %p683 = pneg %p506
      %p684 = pneg %p503
      %p685 = scmp.lt.s32.totalorder %s34, 1
      %s686 = scalar_select %p685, %s34, 1
      %s687 = smul.addr %s686, 2
      %s688 = smul.addr %s687, 8
      %s689 = scalar_lea.vmem %s21, %s688
      %p690 = pneg %p532
      %p691 = pneg %p529
      %p692 = scmp.lt.s32.totalorder %s34, 1
      %s693 = scalar_select %p692, %s34, 1
      %s694 = smul.addr %s693, 2
      %s695 = smul.addr %s694, 8
      %s696 = scalar_lea.vmem %s22, %s695
      %p697 = scmp.lt.s32.totalorder %s34, 1
      %s698 = scalar_select %p697, %s34, 1
      %s699 = smul.addr %s698, 2
      %s700 = smul.addr %s699, 8
      %s701 = scalar_lea.vmem %s0, %s700
      %p702 = scmp.lt.s32.totalorder %s34, 1
      %s703 = scalar_select %p702, %s34, 1
      %s704 = smul.addr %s703, 2
      %s705 = smul.addr %s704, 8
      %s706 = scalar_lea.vmem %s1, %s705
      %p707 = scmp.lt.s32.totalorder %s34, 1
      %s708 = scalar_select %p707, %s34, 1
      %s709 = smul.addr %s708, 2
      %s710 = smul.addr %s709, 8
      %s711 = scalar_lea.vmem %s21, %s710
      %p712 = scmp.lt.s32.totalorder %s34, 1
      %s713 = scalar_select %p712, %s34, 1
      %s714 = smul.addr %s713, 2
      %s715 = smul.addr %s714, 8
      %s716 = scalar_lea.vmem %s22, %s715
      %v717 = vld [vmem:[%s701] sm:$0xff]
      %v718 = vld [vmem:[%s701 + $0x8] sm:$0xff]
      %v719 = vld [vmem:[%s706] sm:$0xff]
      %v720 = vld [vmem:[%s706 + $0x8] sm:$0xff]
      %721 = vrot.lane.b32.xlu0 %v717, 17
      %v722 = vpop.permute.xlu0 %721
      %723 = vrot.lane.b32.xlu0 %v718, 17
      %v724 = vpop.permute.xlu0 %723
      %v725 = vlaneseq
      %v726 = vand.u32 %v725, 127
      %vm727 = vcmp.lt.s32.totalorder %v726, 17
      %v728 = vsel %vm727, %v722, %v724
      %v729 = vsel %vm727, %v724, %v722
      %v730 = vld [vmem:[%s2] sm:$0x3]
      %v732 = vperm.slane %v730, 0
      %v733 = vperm.slane %v730, 1
      %v736 = vmul.f32 %v729, %v732
      %v737 = vmul.f32 %v728, %v733
      %738 = vrot.lane.b32.xlu0 %v717, 16
      %v739 = vpop.permute.xlu0 %738
      %740 = vrot.lane.b32.xlu0 %v718, 16
      %v741 = vpop.permute.xlu0 %740
      %vm742 = vcmp.lt.s32.totalorder %v726, 16
      %v743 = vsel %vm742, %v739, %v741
      %v744 = vsel %vm742, %v741, %v739
      %s745 = scalar_lea.vmem %s2, 2
      %v746 = vld [vmem:[%s745] sm:$0x3]
      %v748 = vperm.slane %v746, 0
      %v749 = vperm.slane %v746, 1
      %v752 = vmul.f32 %v744, %v748
      %v753 = vmul.f32 %v743, %v749
      %754 = vrot.lane.b32.xlu0 %v717, 15
      %v755 = vpop.permute.xlu0 %754
      %756 = vrot.lane.b32.xlu0 %v718, 15
      %v757 = vpop.permute.xlu0 %756
      %vm758 = vcmp.lt.s32.totalorder %v726, 15
      %v759 = vsel %vm758, %v755, %v757
      %v760 = vsel %vm758, %v757, %v755
      %s761 = scalar_lea.vmem %s2, 4
      %v762 = vld [vmem:[%s761] sm:$0x3]
      %v764 = vperm.slane %v762, 0
      %v765 = vperm.slane %v762, 1
      %v768 = vmul.f32 %v760, %v764
      %v769 = vmul.f32 %v759, %v765
      %770 = vrot.lane.b32.xlu0 %v717, 1
      %v771 = vpop.permute.xlu0 %770
      %772 = vrot.lane.b32.xlu0 %v718, 1
      %v773 = vpop.permute.xlu0 %772
      %vm774 = vcmp.lt.s32.totalorder %v726, 1
      %v775 = vsel %vm774, %v771, %v773
      %v776 = vsel %vm774, %v773, %v771
      %s777 = scalar_lea.vmem %s2, 6
      %v778 = vld [vmem:[%s777] sm:$0x3]
      %v780 = vperm.slane %v778, 0
      %v781 = vperm.slane %v778, 1
      %v784 = vmul.f32 %v776, %v780
      %v785 = vmul.f32 %v775, %v781
      %786 = vrot.lane.b32.xlu0 %v717, 127
      %v787 = vpop.permute.xlu0 %786
      %788 = vrot.lane.b32.xlu0 %v718, 127
      %v789 = vpop.permute.xlu0 %788
      %vm790 = vcmp.lt.s32.totalorder %v726, 127
      %v791 = vsel %vm790, %v787, %v789
      %v792 = vsel %vm790, %v789, %v787
      %s793 = scalar_lea.vmem %s2, 10
      %v794 = vld [vmem:[%s793] sm:$0x3]
      %v796 = vperm.slane %v794, 0
      %v797 = vperm.slane %v794, 1
      %v800 = vmul.f32 %v791, %v796
      %v801 = vmul.f32 %v792, %v797
      %802 = vrot.lane.b32.xlu0 %v717, 113
      %v803 = vpop.permute.xlu0 %802
      %804 = vrot.lane.b32.xlu0 %v718, 113
      %v805 = vpop.permute.xlu0 %804
      %vm806 = vcmp.lt.s32.totalorder %v726, 113
      %v807 = vsel %vm806, %v803, %v805
      %v808 = vsel %vm806, %v805, %v803
      %s809 = scalar_lea.vmem %s2, 12
      %v810 = vld [vmem:[%s809] sm:$0x3]
      %v812 = vperm.slane %v810, 0
      %v813 = vperm.slane %v810, 1
      %v816 = vmul.f32 %v807, %v812
      %v817 = vmul.f32 %v808, %v813
      %818 = vrot.lane.b32.xlu0 %v717, 112
      %v819 = vpop.permute.xlu0 %818
      %820 = vrot.lane.b32.xlu0 %v718, 112
      %v821 = vpop.permute.xlu0 %820
      %vm822 = vcmp.lt.s32.totalorder %v726, 112
      %v823 = vsel %vm822, %v819, %v821
      %v824 = vsel %vm822, %v821, %v819
      %s825 = scalar_lea.vmem %s2, 14
      %v826 = vld [vmem:[%s825] sm:$0x3]
      %v828 = vperm.slane %v826, 0
      %v829 = vperm.slane %v826, 1
      %v832 = vmul.f32 %v823, %v828
      %v833 = vmul.f32 %v824, %v829
      %834 = vrot.lane.b32.xlu0 %v717, 111
      %v835 = vpop.permute.xlu0 %834
      %836 = vrot.lane.b32.xlu0 %v718, 111
      %v837 = vpop.permute.xlu0 %836
      %vm838 = vcmp.lt.s32.totalorder %v726, 111
      %v839 = vsel %vm838, %v835, %v837
      %v840 = vsel %vm838, %v837, %v835
      %s841 = scalar_lea.vmem %s2, 16
      %v842 = vld [vmem:[%s841] sm:$0x3]
      %v844 = vperm.slane %v842, 0
      %v845 = vperm.slane %v842, 1
      %v848 = vmul.f32 %v839, %v844
      %v849 = vmul.f32 %v840, %v845
      %v850 = vld [vmem:[%s3] sm:$0xff]
      %v851 = vld [vmem:[%s4] sm:$0xff]
      %853 = vset.pattern.permute.xlu0 0
      %854 = vperm.xlu0 %853, %v851
      %v855 = vpop.permute.xlu0 %854
      %vm857 = vcmask 588800
      %v859 = vsel %vm857, %v850, 0
      %861 = vmatpush.msra.mxu0 0.0
      %862 = vmatpush.msra.mxu0 0.0
      %863 = vmatpush.msra.mxu0 0.0
      %864 = vmatpush.msra.mxu0 0.0
      %865 = vmatpush.msra.mxu0 0.0
      %866 = vmatpush.msra.mxu0 0.0
      %867 = vmatpush.msra.mxu0 0.0
      %868 = vmatpush.msra.mxu0 %v848
      %869 = vmatpush.msra.mxu0 %v832
      %870 = vmatpush.msra.mxu0 %v816
      %871 = vmatpush.msra.mxu0 %v800
      %872 = vmatpush.msra.mxu0 %v717
      %873 = vmatpush.msra.mxu0 %v784
      %874 = vmatpush.msra.mxu0 %v768
      %875 = vmatpush.msra.mxu0 %v752
      %876 = vmatpush.msra.mxu0 %v736
      %877 = vmatmul.f32.gmra.mxu0 %v859
      %v878 = vpop.f32.mrf.mxu0
      %v879 = vadd.f32 %v855, %v878
      %880 = vdwg.mxu0
      %881 = vmatpush.msra.mxu0 0.0
      %882 = vmatpush.msra.mxu0 0.0
      %883 = vmatpush.msra.mxu0 0.0
      %884 = vmatpush.msra.mxu0 0.0
      %885 = vmatpush.msra.mxu0 0.0
      %886 = vmatpush.msra.mxu0 0.0
      %887 = vmatpush.msra.mxu0 0.0
      %888 = vmatpush.msra.mxu0 %v849
      %889 = vmatpush.msra.mxu0 %v833
      %890 = vmatpush.msra.mxu0 %v817
      %891 = vmatpush.msra.mxu0 %v801
      %892 = vmatpush.msra.mxu0 %v718
      %893 = vmatpush.msra.mxu0 %v785
      %894 = vmatpush.msra.mxu0 %v769
      %895 = vmatpush.msra.mxu0 %v753
      %896 = vmatpush.msra.mxu0 %v737
      %897 = vmatmul.f32.gmra.mxu0 %v859
      %v898 = vpop.f32.mrf.mxu0
      %v899 = vadd.f32 %v855, %v898
      %900 = vdwg.mxu0
      %vm901 = vcmp.ge.f32.partialorder %v879, 0.0
      %vm902 = vcmp.ge.f32.partialorder %v899, 0.0
      %v903 = vmul.f32 %v879, 0.1
      %v904 = vmul.f32 %v899, 0.1
      %v905 = vsel %vm901, %v879, %v903
      %v906 = vsel %vm902, %v899, %v904
      %907 = vrot.lane.b32.xlu0 %v905, 17
      %v908 = vpop.permute.xlu0 %907
      %909 = vrot.lane.b32.xlu0 %v906, 17
      %v910 = vpop.permute.xlu0 %909
      %v911 = vsel %vm727, %v908, %v910
      %v912 = vsel %vm727, %v910, %v908
      %v913 = vmul.f32 %v912, %v732
      %v914 = vmul.f32 %v911, %v733
      %915 = vrot.lane.b32.xlu0 %v905, 16
      %v916 = vpop.permute.xlu0 %915
      %917 = vrot.lane.b32.xlu0 %v906, 16
      %v918 = vpop.permute.xlu0 %917
      %v919 = vsel %vm742, %v916, %v918
      %v920 = vsel %vm742, %v918, %v916
      %v921 = vmul.f32 %v920, %v748
      %v922 = vmul.f32 %v919, %v749
      %923 = vrot.lane.b32.xlu0 %v905, 15
      %v924 = vpop.permute.xlu0 %923
      %925 = vrot.lane.b32.xlu0 %v906, 15
      %v926 = vpop.permute.xlu0 %925
      %v927 = vsel %vm758, %v924, %v926
      %v928 = vsel %vm758, %v926, %v924
      %v929 = vmul.f32 %v928, %v764
      %v930 = vmul.f32 %v927, %v765
      %931 = vrot.lane.b32.xlu0 %v905, 1
      %v932 = vpop.permute.xlu0 %931
      %933 = vrot.lane.b32.xlu0 %v906, 1
      %v934 = vpop.permute.xlu0 %933
      %v935 = vsel %vm774, %v932, %v934
      %v936 = vsel %vm774, %v934, %v932
      %v937 = vmul.f32 %v936, %v780
      %v938 = vmul.f32 %v935, %v781
      %939 = vrot.lane.b32.xlu0 %v905, 127
      %v940 = vpop.permute.xlu0 %939
      %941 = vrot.lane.b32.xlu0 %v906, 127
      %v942 = vpop.permute.xlu0 %941
      %v943 = vsel %vm790, %v940, %v942
      %v944 = vsel %vm790, %v942, %v940
      %v945 = vmul.f32 %v943, %v796
      %v946 = vmul.f32 %v944, %v797
      %947 = vrot.lane.b32.xlu0 %v905, 113
      %v948 = vpop.permute.xlu0 %947
      %949 = vrot.lane.b32.xlu0 %v906, 113
      %v950 = vpop.permute.xlu0 %949
      %v951 = vsel %vm806, %v948, %v950
      %v952 = vsel %vm806, %v950, %v948
      %v953 = vmul.f32 %v951, %v812
      %v954 = vmul.f32 %v952, %v813
      %955 = vrot.lane.b32.xlu0 %v905, 112
      %v956 = vpop.permute.xlu0 %955
      %957 = vrot.lane.b32.xlu0 %v906, 112
      %v958 = vpop.permute.xlu0 %957
      %v959 = vsel %vm822, %v956, %v958
      %v960 = vsel %vm822, %v958, %v956
      %v961 = vmul.f32 %v959, %v828
      %v962 = vmul.f32 %v960, %v829
      %963 = vrot.lane.b32.xlu0 %v905, 111
      %v964 = vpop.permute.xlu0 %963
      %965 = vrot.lane.b32.xlu0 %v906, 111
      %v966 = vpop.permute.xlu0 %965
      %v967 = vsel %vm838, %v964, %v966
      %v968 = vsel %vm838, %v966, %v964
      %v969 = vmul.f32 %v967, %v844
      %v970 = vmul.f32 %v968, %v845
      %v971 = vld [vmem:[%s5] sm:$0xff]
      %v972 = vld [vmem:[%s6] sm:$0xff]
      %974 = vset.pattern.permute.xlu0 0
      %975 = vperm.xlu0 %974, %v972
      %v976 = vpop.permute.xlu0 %975
      %v979 = vsel %vm857, %v971, 0
      %981 = vmatpush.msra.mxu0 0.0
      %982 = vmatpush.msra.mxu0 0.0
      %983 = vmatpush.msra.mxu0 0.0
      %984 = vmatpush.msra.mxu0 0.0
      %985 = vmatpush.msra.mxu0 0.0
      %986 = vmatpush.msra.mxu0 0.0
      %987 = vmatpush.msra.mxu0 0.0
      %988 = vmatpush.msra.mxu0 %v969
      %989 = vmatpush.msra.mxu0 %v961
      %990 = vmatpush.msra.mxu0 %v953
      %991 = vmatpush.msra.mxu0 %v945
      %992 = vmatpush.msra.mxu0 %v905
      %993 = vmatpush.msra.mxu0 %v937
      %994 = vmatpush.msra.mxu0 %v929
      %995 = vmatpush.msra.mxu0 %v921
      %996 = vmatpush.msra.mxu0 %v913
      %997 = vmatmul.f32.gmra.mxu0 %v979
      %v998 = vpop.f32.mrf.mxu0
      %v999 = vadd.f32 %v976, %v998
      %1000 = vdwg.mxu0
      %1001 = vmatpush.msra.mxu0 0.0
      %1002 = vmatpush.msra.mxu0 0.0
      %1003 = vmatpush.msra.mxu0 0.0
      %1004 = vmatpush.msra.mxu0 0.0
      %1005 = vmatpush.msra.mxu0 0.0
      %1006 = vmatpush.msra.mxu0 0.0
      %1007 = vmatpush.msra.mxu0 0.0
      %1008 = vmatpush.msra.mxu0 %v970
      %1009 = vmatpush.msra.mxu0 %v962
      %1010 = vmatpush.msra.mxu0 %v954
      %1011 = vmatpush.msra.mxu0 %v946
      %1012 = vmatpush.msra.mxu0 %v906
      %1013 = vmatpush.msra.mxu0 %v938
      %1014 = vmatpush.msra.mxu0 %v930
      %1015 = vmatpush.msra.mxu0 %v922
      %1016 = vmatpush.msra.mxu0 %v914
      %1017 = vmatmul.f32.gmra.mxu0 %v979
      %v1018 = vpop.f32.mrf.mxu0
      %v1019 = vadd.f32 %v976, %v1018
      %1020 = vdwg.mxu0
      %1021 = vrot.lane.b32.xlu0 %v719, 17
      %v1022 = vpop.permute.xlu0 %1021
      %1023 = vrot.lane.b32.xlu0 %v720, 17
      %v1024 = vpop.permute.xlu0 %1023
      %v1025 = vsel %vm727, %v1022, %v1024
      %v1026 = vsel %vm727, %v1024, %v1022
      %v1027 = vmul.f32 %v1026, %v732
      %v1028 = vmul.f32 %v1025, %v733
      %1029 = vrot.lane.b32.xlu0 %v719, 16
      %v1030 = vpop.permute.xlu0 %1029
      %1031 = vrot.lane.b32.xlu0 %v720, 16
      %v1032 = vpop.permute.xlu0 %1031
      %v1033 = vsel %vm742, %v1030, %v1032
      %v1034 = vsel %vm742, %v1032, %v1030
      %v1035 = vmul.f32 %v1034, %v748
      %v1036 = vmul.f32 %v1033, %v749
      %1037 = vrot.lane.b32.xlu0 %v719, 15
      %v1038 = vpop.permute.xlu0 %1037
      %1039 = vrot.lane.b32.xlu0 %v720, 15
      %v1040 = vpop.permute.xlu0 %1039
      %v1041 = vsel %vm758, %v1038, %v1040
      %v1042 = vsel %vm758, %v1040, %v1038
      %v1043 = vmul.f32 %v1042, %v764
      %v1044 = vmul.f32 %v1041, %v765
      %1045 = vrot.lane.b32.xlu0 %v719, 1
      %v1046 = vpop.permute.xlu0 %1045
      %1047 = vrot.lane.b32.xlu0 %v720, 1
      %v1048 = vpop.permute.xlu0 %1047
      %v1049 = vsel %vm774, %v1046, %v1048
      %v1050 = vsel %vm774, %v1048, %v1046
      %v1051 = vmul.f32 %v1050, %v780
      %v1052 = vmul.f32 %v1049, %v781
      %1053 = vrot.lane.b32.xlu0 %v719, 127
      %v1054 = vpop.permute.xlu0 %1053
      %1055 = vrot.lane.b32.xlu0 %v720, 127
      %v1056 = vpop.permute.xlu0 %1055
      %v1057 = vsel %vm790, %v1054, %v1056
      %v1058 = vsel %vm790, %v1056, %v1054
      %v1059 = vmul.f32 %v1057, %v796
      %v1060 = vmul.f32 %v1058, %v797
      %1061 = vrot.lane.b32.xlu0 %v719, 113
      %v1062 = vpop.permute.xlu0 %1061
      %1063 = vrot.lane.b32.xlu0 %v720, 113
      %v1064 = vpop.permute.xlu0 %1063
      %v1065 = vsel %vm806, %v1062, %v1064
      %v1066 = vsel %vm806, %v1064, %v1062
      %v1067 = vmul.f32 %v1065, %v812
      %v1068 = vmul.f32 %v1066, %v813
      %1069 = vrot.lane.b32.xlu0 %v719, 112
      %v1070 = vpop.permute.xlu0 %1069
      %1071 = vrot.lane.b32.xlu0 %v720, 112
      %v1072 = vpop.permute.xlu0 %1071
      %v1073 = vsel %vm822, %v1070, %v1072
      %v1074 = vsel %vm822, %v1072, %v1070
      %v1075 = vmul.f32 %v1073, %v828
      %v1076 = vmul.f32 %v1074, %v829
      %1077 = vrot.lane.b32.xlu0 %v719, 111
      %v1078 = vpop.permute.xlu0 %1077
      %1079 = vrot.lane.b32.xlu0 %v720, 111
      %v1080 = vpop.permute.xlu0 %1079
      %v1081 = vsel %vm838, %v1078, %v1080
      %v1082 = vsel %vm838, %v1080, %v1078
      %v1083 = vmul.f32 %v1081, %v844
      %v1084 = vmul.f32 %v1082, %v845
      %v1085 = vld [vmem:[%s7] sm:$0xff]
      %v1086 = vld [vmem:[%s8] sm:$0xff]
      %1088 = vset.pattern.permute.xlu0 0
      %1089 = vperm.xlu0 %1088, %v1086
      %v1090 = vpop.permute.xlu0 %1089
      %v1093 = vsel %vm857, %v1085, 0
      %1095 = vmatpush.msra.mxu0 0.0
      %1096 = vmatpush.msra.mxu0 0.0
      %1097 = vmatpush.msra.mxu0 0.0
      %1098 = vmatpush.msra.mxu0 0.0
      %1099 = vmatpush.msra.mxu0 0.0
      %1100 = vmatpush.msra.mxu0 0.0
      %1101 = vmatpush.msra.mxu0 0.0
      %1102 = vmatpush.msra.mxu0 %v1083
      %1103 = vmatpush.msra.mxu0 %v1075
      %1104 = vmatpush.msra.mxu0 %v1067
      %1105 = vmatpush.msra.mxu0 %v1059
      %1106 = vmatpush.msra.mxu0 %v719
      %1107 = vmatpush.msra.mxu0 %v1051
      %1108 = vmatpush.msra.mxu0 %v1043
      %1109 = vmatpush.msra.mxu0 %v1035
      %1110 = vmatpush.msra.mxu0 %v1027
      %1111 = vmatmul.f32.gmra.mxu0 %v1093
      %v1112 = vpop.f32.mrf.mxu0
      %v1113 = vadd.f32 %v1090, %v1112
      %1114 = vdwg.mxu0
      %1115 = vmatpush.msra.mxu0 0.0
      %1116 = vmatpush.msra.mxu0 0.0
      %1117 = vmatpush.msra.mxu0 0.0
      %1118 = vmatpush.msra.mxu0 0.0
      %1119 = vmatpush.msra.mxu0 0.0
      %1120 = vmatpush.msra.mxu0 0.0
      %1121 = vmatpush.msra.mxu0 0.0
      %1122 = vmatpush.msra.mxu0 %v1084
      %1123 = vmatpush.msra.mxu0 %v1076
      %1124 = vmatpush.msra.mxu0 %v1068
      %1125 = vmatpush.msra.mxu0 %v1060
      %1126 = vmatpush.msra.mxu0 %v720
      %1127 = vmatpush.msra.mxu0 %v1052
      %1128 = vmatpush.msra.mxu0 %v1044
      %1129 = vmatpush.msra.mxu0 %v1036
      %1130 = vmatpush.msra.mxu0 %v1028
      %1131 = vmatmul.f32.gmra.mxu0 %v1093
      %v1132 = vpop.f32.mrf.mxu0
      %v1133 = vadd.f32 %v1090, %v1132
      %1134 = vdwg.mxu0
      %vm1135 = vcmp.ge.f32.partialorder %v1113, 0.0
      %vm1136 = vcmp.ge.f32.partialorder %v1133, 0.0
      %v1137 = vmul.f32 %v1113, 0.1
      %v1138 = vmul.f32 %v1133, 0.1
      %v1139 = vsel %vm1135, %v1113, %v1137
      %v1140 = vsel %vm1136, %v1133, %v1138
      %1141 = vrot.lane.b32.xlu0 %v1139, 17
      %v1142 = vpop.permute.xlu0 %1141
      %1143 = vrot.lane.b32.xlu0 %v1140, 17
      %v1144 = vpop.permute.xlu0 %1143
      %v1145 = vsel %vm727, %v1142, %v1144
      %v1146 = vsel %vm727, %v1144, %v1142
      %v1147 = vmul.f32 %v1146, %v732
      %v1148 = vmul.f32 %v1145, %v733
      %1149 = vrot.lane.b32.xlu0 %v1139, 16
      %v1150 = vpop.permute.xlu0 %1149
      %1151 = vrot.lane.b32.xlu0 %v1140, 16
      %v1152 = vpop.permute.xlu0 %1151
      %v1153 = vsel %vm742, %v1150, %v1152
      %v1154 = vsel %vm742, %v1152, %v1150
      %v1155 = vmul.f32 %v1154, %v748
      %v1156 = vmul.f32 %v1153, %v749
      %1157 = vrot.lane.b32.xlu0 %v1139, 15
      %v1158 = vpop.permute.xlu0 %1157
      %1159 = vrot.lane.b32.xlu0 %v1140, 15
      %v1160 = vpop.permute.xlu0 %1159
      %v1161 = vsel %vm758, %v1158, %v1160
      %v1162 = vsel %vm758, %v1160, %v1158
      %v1163 = vmul.f32 %v1162, %v764
      %v1164 = vmul.f32 %v1161, %v765
      %1165 = vrot.lane.b32.xlu0 %v1139, 1
      %v1166 = vpop.permute.xlu0 %1165
      %1167 = vrot.lane.b32.xlu0 %v1140, 1
      %v1168 = vpop.permute.xlu0 %1167
      %v1169 = vsel %vm774, %v1166, %v1168
      %v1170 = vsel %vm774, %v1168, %v1166
      %v1171 = vmul.f32 %v1170, %v780
      %v1172 = vmul.f32 %v1169, %v781
      %1173 = vrot.lane.b32.xlu0 %v1139, 127
      %v1174 = vpop.permute.xlu0 %1173
      %1175 = vrot.lane.b32.xlu0 %v1140, 127
      %v1176 = vpop.permute.xlu0 %1175
      %v1177 = vsel %vm790, %v1174, %v1176
      %v1178 = vsel %vm790, %v1176, %v1174
      %v1179 = vmul.f32 %v1177, %v796
      %v1180 = vmul.f32 %v1178, %v797
      %1181 = vrot.lane.b32.xlu0 %v1139, 113
      %v1182 = vpop.permute.xlu0 %1181
      %1183 = vrot.lane.b32.xlu0 %v1140, 113
      %v1184 = vpop.permute.xlu0 %1183
      %v1185 = vsel %vm806, %v1182, %v1184
      %v1186 = vsel %vm806, %v1184, %v1182
      %v1187 = vmul.f32 %v1185, %v812
      %v1188 = vmul.f32 %v1186, %v813
      %1189 = vrot.lane.b32.xlu0 %v1139, 112
      %v1190 = vpop.permute.xlu0 %1189
      %1191 = vrot.lane.b32.xlu0 %v1140, 112
      %v1192 = vpop.permute.xlu0 %1191
      %v1193 = vsel %vm822, %v1190, %v1192
      %v1194 = vsel %vm822, %v1192, %v1190
      %v1195 = vmul.f32 %v1193, %v828
      %v1196 = vmul.f32 %v1194, %v829
      %1197 = vrot.lane.b32.xlu0 %v1139, 111
      %v1198 = vpop.permute.xlu0 %1197
      %1199 = vrot.lane.b32.xlu0 %v1140, 111
      %v1200 = vpop.permute.xlu0 %1199
      %v1201 = vsel %vm838, %v1198, %v1200
      %v1202 = vsel %vm838, %v1200, %v1198
      %v1203 = vmul.f32 %v1201, %v844
      %v1204 = vmul.f32 %v1202, %v845
      %v1205 = vld [vmem:[%s9] sm:$0xff]
      %v1206 = vld [vmem:[%s10] sm:$0xff]
      %1208 = vset.pattern.permute.xlu0 0
      %1209 = vperm.xlu0 %1208, %v1206
      %v1210 = vpop.permute.xlu0 %1209
      %v1213 = vsel %vm857, %v1205, 0
      %1215 = vmatpush.msra.mxu0 0.0
      %1216 = vmatpush.msra.mxu0 0.0
      %1217 = vmatpush.msra.mxu0 0.0
      %1218 = vmatpush.msra.mxu0 0.0
      %1219 = vmatpush.msra.mxu0 0.0
      %1220 = vmatpush.msra.mxu0 0.0
      %1221 = vmatpush.msra.mxu0 0.0
      %1222 = vmatpush.msra.mxu0 %v1203
      %1223 = vmatpush.msra.mxu0 %v1195
      %1224 = vmatpush.msra.mxu0 %v1187
      %1225 = vmatpush.msra.mxu0 %v1179
      %1226 = vmatpush.msra.mxu0 %v1139
      %1227 = vmatpush.msra.mxu0 %v1171
      %1228 = vmatpush.msra.mxu0 %v1163
      %1229 = vmatpush.msra.mxu0 %v1155
      %1230 = vmatpush.msra.mxu0 %v1147
      %1231 = vmatmul.f32.gmra.mxu0 %v1213
      %v1232 = vpop.f32.mrf.mxu0
      %v1233 = vadd.f32 %v1210, %v1232
      %1234 = vdwg.mxu0
      %1235 = vmatpush.msra.mxu0 0.0
      %1236 = vmatpush.msra.mxu0 0.0
      %1237 = vmatpush.msra.mxu0 0.0
      %1238 = vmatpush.msra.mxu0 0.0
      %1239 = vmatpush.msra.mxu0 0.0
      %1240 = vmatpush.msra.mxu0 0.0
      %1241 = vmatpush.msra.mxu0 0.0
      %1242 = vmatpush.msra.mxu0 %v1204
      %1243 = vmatpush.msra.mxu0 %v1196
      %1244 = vmatpush.msra.mxu0 %v1188
      %1245 = vmatpush.msra.mxu0 %v1180
      %1246 = vmatpush.msra.mxu0 %v1140
      %1247 = vmatpush.msra.mxu0 %v1172
      %1248 = vmatpush.msra.mxu0 %v1164
      %1249 = vmatpush.msra.mxu0 %v1156
      %1250 = vmatpush.msra.mxu0 %v1148
      %1251 = vmatmul.f32.gmra.mxu0 %v1213
      %v1252 = vpop.f32.mrf.mxu0
      %v1253 = vadd.f32 %v1210, %v1252
      %1254 = vdwg.mxu0
      %vm1255 = vcmp.ge.f32.partialorder %v999, 0.0
      %vm1256 = vcmp.ge.f32.partialorder %v1019, 0.0
      %v1257 = vmul.f32 %v999, 0.1
      %v1258 = vmul.f32 %v1019, 0.1
      %v1259 = vsel %vm1255, %v999, %v1257
      %v1260 = vsel %vm1256, %v1019, %v1258
      %1261 = vrot.lane.b32.xlu0 %v1259, 17
      %v1262 = vpop.permute.xlu0 %1261
      %1263 = vrot.lane.b32.xlu0 %v1260, 17
      %v1264 = vpop.permute.xlu0 %1263
      %v1265 = vsel %vm727, %v1262, %v1264
      %v1266 = vsel %vm727, %v1264, %v1262
      %v1267 = vmul.f32 %v1266, %v732
      %v1268 = vmul.f32 %v1265, %v733
      %1269 = vrot.lane.b32.xlu0 %v1259, 16
      %v1270 = vpop.permute.xlu0 %1269
      %1271 = vrot.lane.b32.xlu0 %v1260, 16
      %v1272 = vpop.permute.xlu0 %1271
      %v1273 = vsel %vm742, %v1270, %v1272
      %v1274 = vsel %vm742, %v1272, %v1270
      %v1275 = vmul.f32 %v1274, %v748
      %v1276 = vmul.f32 %v1273, %v749
      %1277 = vrot.lane.b32.xlu0 %v1259, 15
      %v1278 = vpop.permute.xlu0 %1277
      %1279 = vrot.lane.b32.xlu0 %v1260, 15
      %v1280 = vpop.permute.xlu0 %1279
      %v1281 = vsel %vm758, %v1278, %v1280
      %v1282 = vsel %vm758, %v1280, %v1278
      %v1283 = vmul.f32 %v1282, %v764
      %v1284 = vmul.f32 %v1281, %v765
      %1285 = vrot.lane.b32.xlu0 %v1259, 1
      %v1286 = vpop.permute.xlu0 %1285
      %1287 = vrot.lane.b32.xlu0 %v1260, 1
      %v1288 = vpop.permute.xlu0 %1287
      %v1289 = vsel %vm774, %v1286, %v1288
      %v1290 = vsel %vm774, %v1288, %v1286
      %v1291 = vmul.f32 %v1290, %v780
      %v1292 = vmul.f32 %v1289, %v781
      %1293 = vrot.lane.b32.xlu0 %v1259, 127
      %v1294 = vpop.permute.xlu0 %1293
      %1295 = vrot.lane.b32.xlu0 %v1260, 127
      %v1296 = vpop.permute.xlu0 %1295
      %v1297 = vsel %vm790, %v1294, %v1296
      %v1298 = vsel %vm790, %v1296, %v1294
      %v1299 = vmul.f32 %v1297, %v796
      %v1300 = vmul.f32 %v1298, %v797
      %1301 = vrot.lane.b32.xlu0 %v1259, 113
      %v1302 = vpop.permute.xlu0 %1301
      %1303 = vrot.lane.b32.xlu0 %v1260, 113
      %v1304 = vpop.permute.xlu0 %1303
      %v1305 = vsel %vm806, %v1302, %v1304
      %v1306 = vsel %vm806, %v1304, %v1302
      %v1307 = vmul.f32 %v1305, %v812
      %v1308 = vmul.f32 %v1306, %v813
      %1309 = vrot.lane.b32.xlu0 %v1259, 112
      %v1310 = vpop.permute.xlu0 %1309
      %1311 = vrot.lane.b32.xlu0 %v1260, 112
      %v1312 = vpop.permute.xlu0 %1311
      %v1313 = vsel %vm822, %v1310, %v1312
      %v1314 = vsel %vm822, %v1312, %v1310
      %v1315 = vmul.f32 %v1313, %v828
      %v1316 = vmul.f32 %v1314, %v829
      %1317 = vrot.lane.b32.xlu0 %v1259, 111
      %v1318 = vpop.permute.xlu0 %1317
      %1319 = vrot.lane.b32.xlu0 %v1260, 111
      %v1320 = vpop.permute.xlu0 %1319
      %v1321 = vsel %vm838, %v1318, %v1320
      %v1322 = vsel %vm838, %v1320, %v1318
      %v1323 = vmul.f32 %v1321, %v844
      %v1324 = vmul.f32 %v1322, %v845
      %vm1325 = vcmp.ge.f32.partialorder %v1233, 0.0
      %vm1326 = vcmp.ge.f32.partialorder %v1253, 0.0
      %v1327 = vmul.f32 %v1233, 0.1
      %v1328 = vmul.f32 %v1253, 0.1
      %v1329 = vsel %vm1325, %v1233, %v1327
      %v1330 = vsel %vm1326, %v1253, %v1328
      %1331 = vrot.lane.b32.xlu0 %v1329, 17
      %v1332 = vpop.permute.xlu0 %1331
      %1333 = vrot.lane.b32.xlu0 %v1330, 17
      %v1334 = vpop.permute.xlu0 %1333
      %v1335 = vsel %vm727, %v1332, %v1334
      %v1336 = vsel %vm727, %v1334, %v1332
      %v1337 = vmul.f32 %v1336, %v732
      %v1338 = vmul.f32 %v1335, %v733
      %1339 = vrot.lane.b32.xlu0 %v1329, 16
      %v1340 = vpop.permute.xlu0 %1339
      %1341 = vrot.lane.b32.xlu0 %v1330, 16
      %v1342 = vpop.permute.xlu0 %1341
      %v1343 = vsel %vm742, %v1340, %v1342
      %v1344 = vsel %vm742, %v1342, %v1340
      %v1345 = vmul.f32 %v1344, %v748
      %v1346 = vmul.f32 %v1343, %v749
      %1347 = vrot.lane.b32.xlu0 %v1329, 15
      %v1348 = vpop.permute.xlu0 %1347
      %1349 = vrot.lane.b32.xlu0 %v1330, 15
      %v1350 = vpop.permute.xlu0 %1349
      %v1351 = vsel %vm758, %v1348, %v1350
      %v1352 = vsel %vm758, %v1350, %v1348
      %v1353 = vmul.f32 %v1352, %v764
      %v1354 = vmul.f32 %v1351, %v765
      %1355 = vrot.lane.b32.xlu0 %v1329, 1
      %v1356 = vpop.permute.xlu0 %1355
      %1357 = vrot.lane.b32.xlu0 %v1330, 1
      %v1358 = vpop.permute.xlu0 %1357
      %v1359 = vsel %vm774, %v1356, %v1358
      %v1360 = vsel %vm774, %v1358, %v1356
      %v1361 = vmul.f32 %v1360, %v780
      %v1362 = vmul.f32 %v1359, %v781
      %1363 = vrot.lane.b32.xlu0 %v1329, 127
      %v1364 = vpop.permute.xlu0 %1363
      %1365 = vrot.lane.b32.xlu0 %v1330, 127
      %v1366 = vpop.permute.xlu0 %1365
      %v1367 = vsel %vm790, %v1364, %v1366
      %v1368 = vsel %vm790, %v1366, %v1364
      %v1369 = vmul.f32 %v1367, %v796
      %v1370 = vmul.f32 %v1368, %v797
      %1371 = vrot.lane.b32.xlu0 %v1329, 113
      %v1372 = vpop.permute.xlu0 %1371
      %1373 = vrot.lane.b32.xlu0 %v1330, 113
      %v1374 = vpop.permute.xlu0 %1373
      %v1375 = vsel %vm806, %v1372, %v1374
      %v1376 = vsel %vm806, %v1374, %v1372
      %v1377 = vmul.f32 %v1375, %v812
      %v1378 = vmul.f32 %v1376, %v813
      %1379 = vrot.lane.b32.xlu0 %v1329, 112
      %v1380 = vpop.permute.xlu0 %1379
      %1381 = vrot.lane.b32.xlu0 %v1330, 112
      %v1382 = vpop.permute.xlu0 %1381
      %v1383 = vsel %vm822, %v1380, %v1382
      %v1384 = vsel %vm822, %v1382, %v1380
      %v1385 = vmul.f32 %v1383, %v828
      %v1386 = vmul.f32 %v1384, %v829
      %1387 = vrot.lane.b32.xlu0 %v1329, 111
      %v1388 = vpop.permute.xlu0 %1387
      %1389 = vrot.lane.b32.xlu0 %v1330, 111
      %v1390 = vpop.permute.xlu0 %1389
      %v1391 = vsel %vm838, %v1388, %v1390
      %v1392 = vsel %vm838, %v1390, %v1388
      %v1393 = vmul.f32 %v1391, %v844
      %v1394 = vmul.f32 %v1392, %v845
      %v1395 = vld [vmem:[%s11] sm:$0xff]
      %v1396 = vld [vmem:[%s11 + $0x8] sm:$0xff]
      %v1397 = vld [vmem:[%s12] sm:$0xff]
      %1399 = vset.pattern.permute.xlu0 0
      %1400 = vperm.xlu0 %1399, %v1397
      %v1401 = vpop.permute.xlu0 %1400
      %vm1403 = vcmask 130048
      %v1405 = vsel %vm1403, %v1396, 0
      %1407 = vmatpush.msra.mxu0 %v1377
      %1408 = vmatpush.msra.mxu0 %v1369
      %1409 = vmatpush.msra.mxu0 %v1329
      %1410 = vmatpush.msra.mxu0 %v1361
      %1411 = vmatpush.msra.mxu0 %v1353
      %1412 = vmatpush.msra.mxu0 %v1345
      %1413 = vmatpush.msra.mxu0 %v1337
      %1414 = vmatpush.msra.mxu0 %v1323
      %1415 = vmatpush.msra.mxu0 %v1315
      %1416 = vmatpush.msra.mxu0 %v1307
      %1417 = vmatpush.msra.mxu0 %v1299
      %1418 = vmatpush.msra.mxu0 %v1259
      %1419 = vmatpush.msra.mxu0 %v1291
      %1420 = vmatpush.msra.mxu0 %v1283
      %1421 = vmatpush.msra.mxu0 %v1275
      %1422 = vmatpush.msra.mxu0 %v1267
      %1423 = vmatmul.f32.gmra.mxu0 %v1395
      %v1424 = vpop.f32.mrf.mxu0
      %v1425 = vadd.f32 %v1401, %v1424
      %1426 = vdwg.mxu0
      %1427 = vmatpush.msra.mxu0 0.0
      %1428 = vmatpush.msra.mxu0 0.0
      %1429 = vmatpush.msra.mxu0 0.0
      %1430 = vmatpush.msra.mxu0 0.0
      %1431 = vmatpush.msra.mxu0 0.0
      %1432 = vmatpush.msra.mxu0 0.0
      %1433 = vmatpush.msra.mxu0 0.0
      %1434 = vmatpush.msra.mxu0 0.0
      %1435 = vmatpush.msra.mxu0 0.0
      %1436 = vmatpush.msra.mxu0 0.0
      %1437 = vmatpush.msra.mxu0 0.0
      %1438 = vmatpush.msra.mxu0 0.0
      %1439 = vmatpush.msra.mxu0 0.0
      %1440 = vmatpush.msra.mxu0 0.0
      %1441 = vmatpush.msra.mxu0 %v1393
      %1442 = vmatpush.msra.mxu0 %v1385
      %1443 = vmatmul.f32.gmra.mxu0 %v1405
      %v1444 = vpop.f32.mrf.mxu0
      %v1445 = vadd.f32 %v1425, %v1444
      %1446 = vdwg.mxu0
      %1447 = vmatpush.msra.mxu0 %v1378
      %1448 = vmatpush.msra.mxu0 %v1370
      %1449 = vmatpush.msra.mxu0 %v1330
      %1450 = vmatpush.msra.mxu0 %v1362
      %1451 = vmatpush.msra.mxu0 %v1354
      %1452 = vmatpush.msra.mxu0 %v1346
      %1453 = vmatpush.msra.mxu0 %v1338
      %1454 = vmatpush.msra.mxu0 %v1324
      %1455 = vmatpush.msra.mxu0 %v1316
      %1456 = vmatpush.msra.mxu0 %v1308
      %1457 = vmatpush.msra.mxu0 %v1300
      %1458 = vmatpush.msra.mxu0 %v1260
      %1459 = vmatpush.msra.mxu0 %v1292
      %1460 = vmatpush.msra.mxu0 %v1284
      %1461 = vmatpush.msra.mxu0 %v1276
      %1462 = vmatpush.msra.mxu0 %v1268
      %1463 = vmatmul.f32.gmra.mxu0 %v1395
      %v1464 = vpop.f32.mrf.mxu0
      %v1465 = vadd.f32 %v1401, %v1464
      %1466 = vdwg.mxu0
      %1467 = vmatpush.msra.mxu0 0.0
      %1468 = vmatpush.msra.mxu0 0.0
      %1469 = vmatpush.msra.mxu0 0.0
      %1470 = vmatpush.msra.mxu0 0.0
      %1471 = vmatpush.msra.mxu0 0.0
      %1472 = vmatpush.msra.mxu0 0.0
      %1473 = vmatpush.msra.mxu0 0.0
      %1474 = vmatpush.msra.mxu0 0.0
      %1475 = vmatpush.msra.mxu0 0.0
      %1476 = vmatpush.msra.mxu0 0.0
      %1477 = vmatpush.msra.mxu0 0.0
      %1478 = vmatpush.msra.mxu0 0.0
      %1479 = vmatpush.msra.mxu0 0.0
      %1480 = vmatpush.msra.mxu0 0.0
      %1481 = vmatpush.msra.mxu0 %v1394
      %1482 = vmatpush.msra.mxu0 %v1386
      %1483 = vmatmul.f32.gmra.mxu0 %v1405
      %v1484 = vpop.f32.mrf.mxu0
      %v1485 = vadd.f32 %v1465, %v1484
      %1486 = vdwg.mxu0
      %v1487 = vadd.f32 %v1445, %v1485
      %1488 = vadd.xlane.f32.xlu0 %v1487
      %v1489 = vpop.xlane.xlu0 %1488
      %v1490 = vmul.f32 %v1489, 0.00390625
      %v1491 = vld [vmem:[%s13] sm:$0xff]
      %v1492 = vmul.f32 %v1491, %v1490
      %vm1493 = vcmask 15360
      %v1494 = vsel %vm1493, %v1492, 0.0
      %v1495 = vrot.slane %v1494, 4
      %v1496 = vadd.f32 %v1494, %v1495
      %v1497 = vrot.slane %v1496, 2
      %v1498 = vadd.f32 %v1496, %v1497
      %v1499 = vrot.slane %v1498, 1
      %v1500 = vadd.f32 %v1498, %v1499
      %v1501 = vld [vmem:[%s14] sm:$0x1]
      %v1502 = vadd.f32 %v1500, %v1501
      %v1503 = vmax.f32 %v1502, 0.0
      %v1504 = vld [vmem:[%s15] sm:$0xff]
      %v1505 = vperm.slane %v1503, 0
      %v1506 = vmul.f32 %v1504, %v1505
      %v1507 = vsel %vm1493, %v1506, 0.0
      %1508 = vadd.xlane.f32.xlu0 %v1507
      %v1509 = vpop.xlane.xlu0 %1508
      %v1510 = vld [vmem:[%s16] sm:$0xff]
      %v1511 = vadd.f32 %v1509, %v1510
      %v1512 = vsub.f32 0.0, %v1511
      %v1513 = vmul.f32 %v1512, 1.442695
      %v1514 = vpow.pop %v1513
      %v1515 = vadd.f32 %v1514, 1.0
      %v1516 = vrcp.pop %v1515
      %v1517 = vmul.f32 %v1515, %v1516
      %v1518 = vsub.f32 1.0, %v1517
      %v1519 = vmul.f32 %v1516, %v1518
      %v1520 = vadd.f32 %v1516, %v1519
      %vm1521 = vweird.f32 %v1515
      %vm1522 = vweird.f32 %v1516
      %vm1523 = vmor %vm1521, %vm1522
      %v1524 = vsel %vm1523, %v1516, %v1520
      %v1525 = vand.u32 2147483647, %v1515
      %vm1526 = vcmp.eq.f32.partialorder %v1525, 8.507059e+37
      %v1527 = vand.u32 %v1515, 2147483648
      %v1528 = vor.u32 1.1754944e-38, %v1527
      %v1529 = vsel %vm1526, %v1528, %v1524
      %v1530 = vmul.f32 1.0, %v1529
      %1532 = vset.pattern.permute.xlu0 0
      %1533 = vperm.xlu0 %1532, %v1530
      %v1534 = vpop.permute.xlu0 %1533
      %v1536 = vmul.f32 %v1445, %v1534
      %v1537 = vmul.f32 %v1485, %v1534
      %v1538 = vadd.f32 %v717, %v1536
      %v1539 = vadd.f32 %v718, %v1537
      %v1540 = vadd.f32 %v1233, %v1253
      %1541 = vadd.xlane.f32.xlu0 %v1540
      %v1542 = vpop.xlane.xlu0 %1541
      %v1543 = vmul.f32 %v1542, 0.00390625
      %v1544 = vld [vmem:[%s17] sm:$0xff]
      %v1545 = vmul.f32 %v1544, %v1543
      %v1546 = vsel %vm1493, %v1545, 0.0
      %v1547 = vrot.slane %v1546, 4
      %v1548 = vadd.f32 %v1546, %v1547
      %v1549 = vrot.slane %v1548, 2
      %v1550 = vadd.f32 %v1548, %v1549
      %v1551 = vrot.slane %v1550, 1
      %v1552 = vadd.f32 %v1550, %v1551
      %v1553 = vld [vmem:[%s18] sm:$0x1]
      %v1554 = vadd.f32 %v1552, %v1553
      %v1555 = vmax.f32 %v1554, 0.0
      %v1556 = vld [vmem:[%s19] sm:$0xff]
      %v1557 = vperm.slane %v1555, 0
      %v1558 = vmul.f32 %v1556, %v1557
      %v1559 = vsel %vm1493, %v1558, 0.0
      %1560 = vadd.xlane.f32.xlu0 %v1559
      %v1561 = vpop.xlane.xlu0 %1560
      %v1562 = vld [vmem:[%s20] sm:$0xff]
      %v1563 = vadd.f32 %v1561, %v1562
      %v1564 = vsub.f32 0.0, %v1563
      %v1565 = vmul.f32 %v1564, 1.442695
      %v1566 = vpow.pop %v1565
      %v1567 = vadd.f32 %v1566, 1.0
      %v1568 = vrcp.pop %v1567
      %v1569 = vmul.f32 %v1567, %v1568
      %v1570 = vsub.f32 1.0, %v1569
      %v1571 = vmul.f32 %v1568, %v1570
      %v1572 = vadd.f32 %v1568, %v1571
      %vm1573 = vweird.f32 %v1567
      %vm1574 = vweird.f32 %v1568
      %vm1575 = vmor %vm1573, %vm1574
      %v1576 = vsel %vm1575, %v1568, %v1572
      %v1577 = vand.u32 2147483647, %v1567
      %vm1578 = vcmp.eq.f32.partialorder %v1577, 8.507059e+37
      %v1579 = vand.u32 %v1567, 2147483648
      %v1580 = vor.u32 1.1754944e-38, %v1579
      %v1581 = vsel %vm1578, %v1580, %v1576
      %v1582 = vmul.f32 1.0, %v1581
      %1584 = vset.pattern.permute.xlu0 0
      %1585 = vperm.xlu0 %1584, %v1582
      %v1586 = vpop.permute.xlu0 %1585
      %v1588 = vmul.f32 %v1233, %v1586
      %v1589 = vmul.f32 %v1253, %v1586
      %v1590 = vadd.f32 %v719, %v1588
      %v1591 = vadd.f32 %v720, %v1589
      %1592 = vst [vmem:[%s711] sm:$0xff] %v1538
      %1593 = vst [vmem:[%s711 + $0x8] sm:$0xff] %v1539
      %1594 = vst [vmem:[%s716] sm:$0xff] %v1590
      %1595 = vst [vmem:[%s716 + $0x8] sm:$0xff] %v1591
      %p1596 = scmp.lt.s32.totalorder %s34, 1
      %s1597 = scalar_select %p1596, %s34, 1
      %s1598 = smul.addr %s1597, 2
      %s1599 = smul.addr %s1598, 8
      %s1600 = scalar_lea.vmem %s21, %s1599
      %p1601 = scmp.lt.s32.totalorder %s34, 1
      %s1602 = scalar_select %p1601, %s34, 1
      %s1603 = smul.addr %s1602, 2
      %s1604 = smul.addr %s1603, 8
      %s1605 = scalar_lea.vmem %s22, %s1604
      // Predicated region
      $region105: #{dpcab_forward.1} parent=103 // pred_check
        %p1606 = pneg %p503
      $region106: #{dpcab_forward.1} parent=103 // pred_check_branch
        %1608 = sbr.rel (%p1606) target = $region108
      $region107: #{dpcab_forward.1} parent=103 // pred_region
        _
      $region108: #{dpcab_forward.1} parent=103 // pred_fallthru
        _
      // Predicated region
      $region109: #{dpcab_forward.1} parent=103 // pred_check
        %p1609 = pneg %p529
      $region110: #{dpcab_forward.1} parent=103 // pred_check_branch
        %1611 = sbr.rel (%p1609) target = $region112
      $region111: #{dpcab_forward.1} parent=103 // pred_region
        _
      $region112: #{dpcab_forward.1} parent=103 // pred_fallthru
        _
    $region104: #{dpcab_forward.1} parent=5 // pred_fallthru
      _
    %p1612 = scmp.le.s32.totalorder 2, %s29
    // Predicated region
    $region113: #{dpcab_forward.1} parent=5 // pred_check
      %p1613 = pneg %p1612
    $region114: #{dpcab_forward.1} parent=5 // pred_check_branch
      %1615 = sbr.rel (%p1613) target = $region116
    $region115: #{dpcab_forward.1} parent=5 // pred_region
      %s1616 = ssub.s32 %s29, 2
      // Predicated region
      $region117: #{dpcab_forward.1} parent=115 // pred_check
        %p1617 = pneg %p509
      $region118: #{dpcab_forward.1} parent=115 // pred_check_branch
        %1619 = sbr.rel (%p1617) target = $region120
      $region119: #{dpcab_forward.1} parent=115 // pred_region
        %p1620 = scmp.lt.s32.totalorder %s35, 1
        %s1621 = scalar_select %p1620, %s35, 1
        %s1622 = smul.addr %s1621, 2
        %s1623 = smul.addr %s1622, 8
        %s1624 = scalar_lea.vmem %s21, %s1623
      $region120: #{dpcab_forward.1} parent=115 // pred_fallthru
        _
      // Predicated region
      $region121: #{dpcab_forward.1} parent=115 // pred_check
        %p1625 = pneg %p535
      $region122: #{dpcab_forward.1} parent=115 // pred_check_branch
        %1627 = sbr.rel (%p1625) target = $region124
      $region123: #{dpcab_forward.1} parent=115 // pred_region
        %p1628 = scmp.lt.s32.totalorder %s35, 1
        %s1629 = scalar_select %p1628, %s35, 1
        %s1630 = smul.addr %s1629, 2
        %s1631 = smul.addr %s1630, 8
        %s1632 = scalar_lea.vmem %s22, %s1631
      $region124: #{dpcab_forward.1} parent=115 // pred_fallthru
        _
    $region116: #{dpcab_forward.1} parent=5 // pred_fallthru
      _
  $region6: #{dpcab_forward.1} parent=0 // loop_footer
    %s33 = sadd.s32 1, %s29
  $region7: #{dpcab_forward.1} parent=0 // loop_footer_branch
    %28 = sbr.rel target = $region3
  $region8: #{dpcab_forward.1} parent=0 // loop_exit
    _

</llo_original>
